<compile_context>
chip_gen: v6e
topology: v6e:2x2x1
jax: 0.10.0
libtpu: 0.0.40
codegen_flags: <defaults>
</compile_context>

<pallas_src>
from collections import OrderedDict

import numpy as np
import jax
import jax.numpy as jnp
from jax.experimental import pallas as pl
from jax.experimental.pallas import tpu as pltpu

# ----------------------------- static sizes ---------------------------------
H = W = 16            # image spatial size (small demo shape)
N = H * W             # flattened pixel count
PATCH = 9             # 3x3 conv taps
PATCH_PAD = 16        # padded contraction dim (col 9 = constant 1, 10..15 = 0)
BIAS_COL = PATCH      # column of the patch matrix that carries the constant 1
CHANNELS = 16         # hidden channels: 15 conv channels + 1 constant bias chan
HIDDEN = CHANNELS - 1
DESC_DIM = 32         # descriptor dimension
HEAD_OUT = 128        # lane-dense head slab: [0:32]=desc, [32]=score, rest 0
SCORE_COL = DESC_DIM
MAX_KPTS = 64         # keypoints kept per image = min(max_keypoints, H*W)
KPTS_PAD = 128        # padded keypoint count -> 128x128 lane-dense matcher tile


# ----------------------------- LRU cache (host) ------------------------------
class LRUCache:
    def __init__(self, capacity: int = None):
        if capacity is None or capacity <= 0:
            capacity = 100
        self.capacity = capacity
        self.cache = OrderedDict()

    def get(self, name):
        if name is None or name not in self.cache:
            return None
        print("Reusing cached results")
        self.cache.move_to_end(name, last=True)
        return self.cache[name]

    def put(self, name, value):
        if name is None:
            return
        if name in self.cache:
            self.cache[name] = value
            self.cache.move_to_end(name, last=True)
        else:
            if len(self.cache) >= self.capacity:
                self.cache.popitem(last=False)
            self.cache[name] = value


# ----------------------------- Pallas kernels --------------------------------
def _extract_kernel(patches_ref, w1_ref, whead_ref, out_ref):
    """Fused extractor for BOTH images.

    patches_ref: (2N, PATCH_PAD)  im2col'd grayscale patches, col 9 == 1 (bias)
    w1_ref:      (PATCH_PAD, CHANNELS)  conv weights; bias folded in row 9;
                 channel 15 is a constant-1 bias channel
    whead_ref:   (CHANNELS, HEAD_OUT)   fused desc+score head (biases in row 15)
    out_ref:     (2N, HEAD_OUT)  cols 0..31 L2-normalized desc, col 32 score
    """
    feat = jnp.dot(patches_ref[...], w1_ref[...],
                   preferred_element_type=jnp.float32)
    feat = jnp.maximum(feat, 0.0)                                    # (2N, C)

    head = jnp.dot(feat, whead_ref[...],
                   preferred_element_type=jnp.float32)               # (2N, 128)

    col = jax.lax.broadcasted_iota(jnp.int32, head.shape, 1)
    is_desc = col < DESC_DIM
    is_score = col == SCORE_COL

    desc = jnp.where(is_desc, head, 0.0)
    inv_norm = jax.lax.rsqrt(
        jnp.sum(desc * desc, axis=-1, keepdims=True) + 1e-12)
    score = jax.nn.sigmoid(head)                                     # only col 32 used
    out_ref[...] = jnp.where(is_desc, head * inv_norm,
                             jnp.where(is_score, score, 0.0))


def _make_match_kernel(match_threshold: float):
    thr = float(match_threshold)

    def _match_kernel(d0_ref, d1_ref, v0_ref, v1_ref, out_ref):
        """Mutual-NN matcher; emits only per-row reductions (lane-dense slab).

        d0_ref/d1_ref: (KPTS_PAD, DESC_DIM)  zero-padded descriptors
        v0_ref:        (KPTS_PAD, 1)         validity of image-0 keypoints
        v1_ref:        (1, KPTS_PAD)         validity of image-1 keypoints
        out_ref:       (KPTS_PAD, KPTS_PAD)  col0=match idx, col1=mconf, col2=mask
        """
        sim = jax.lax.dot_general(d0_ref[...], d1_ref[...],
                                  (((1,), (1,)), ((), ())),
                                  preferred_element_type=jnp.float32)  # (K, K)

        valid_pair = (v0_ref[...] > 0.5) & (v1_ref[...] > 0.5)          # (K, K)
        simv = jnp.where(valid_pair, sim, -1e9)

        max0 = jnp.max(simv, axis=1, keepdims=True)                     # row max
        max1 = jnp.max(simv, axis=0, keepdims=True)                     # col max
        mutual = (simv >= max0) & (simv >= max1) & valid_pair

        # first-argmax per row (matches jnp.argmax tie-break), no gather needed
        col_f = jax.lax.broadcasted_iota(jnp.int32, simv.shape, 1).astype(jnp.float32)
        match_idx = jnp.min(jnp.where(simv >= max0, col_f, float(KPTS_PAD)),
                            axis=1, keepdims=True)                      # (K, 1)

        row_mutual = jnp.max(mutual.astype(jnp.float32), axis=1,
                             keepdims=True) > 0.5                       # (K, 1)
        # NOTE: confidence scale kept from the original synthetic matcher:
        # conf = clip((sim+1)/2), thresholded at match_threshold.
        conf_best = jnp.clip((max0 + 1.0) * 0.5, 0.0, 1.0)              # (K, 1)
        row_pass = row_mutual & (conf_best > thr) & (v0_ref[...] > 0.5)

        mconf = jnp.where(row_pass, conf_best, 0.0)
        mask_f = row_pass.astype(jnp.float32)

        out_col = jax.lax.broadcasted_iota(jnp.int32, simv.shape, 1)
        out_ref[...] = (jnp.where(out_col == 0, match_idx, 0.0)
                        + jnp.where(out_col == 1, mconf, 0.0)
                        + jnp.where(out_col == 2, mask_f, 0.0))
    return _match_kernel


def _vmem_spec():
    return pl.BlockSpec(memory_space=pltpu.MemorySpace.VMEM)


def extract_features_pallas(patches2, w1, whead):
    """Single launch for both images (patches2: (2N, PATCH_PAD))."""
    return pl.pallas_call(
        _extract_kernel,
        out_shape=jax.ShapeDtypeStruct((2 * N, HEAD_OUT), jnp.float32),
        in_specs=[_vmem_spec(), _vmem_spec(), _vmem_spec()],
        out_specs=_vmem_spec(),
    )(patches2, w1, whead)


def make_match_pallas(match_threshold):
    kernel = _make_match_kernel(match_threshold)

    def run(d0, d1, v0, v1):
        return pl.pallas_call(
            kernel,
            out_shape=jax.ShapeDtypeStruct((KPTS_PAD, KPTS_PAD), jnp.float32),
            in_specs=[_vmem_spec(), _vmem_spec(), _vmem_spec(), _vmem_spec()],
            out_specs=_vmem_spec(),
        )(d0, d1, v0, v1)
    return run


# ----------------------------- JAX glue --------------------------------------
def _rgb_to_patches(img_hwc):
    """RGB (H, W, 3) in [0,1] -> grayscale -> im2col patches (N, PATCH_PAD).

    Column BIAS_COL is set to 1.0 so the conv bias can live in the weights.
    """
    gray = (0.299 * img_hwc[..., 0] + 0.587 * img_hwc[..., 1]
            + 0.114 * img_hwc[..., 2]).astype(jnp.float32)             # (H, W)
    pad = jnp.pad(gray, 1)
    cols = [pad[dy:dy + H, dx:dx + W] for dy in range(3) for dx in range(3)]
    patches = jnp.stack(cols, axis=-1).reshape(N, PATCH)               # (N, 9)
    patches = jnp.pad(patches, ((0, 0), (0, PATCH_PAD - PATCH)))       # (N, 16)
    patches = patches.at[:, BIAS_COL].set(1.0)                         # bias column
    return patches


def _select_keypoints(slab_half, detect_threshold):
    """Top-k keypoint selection + descriptor gather from one image's slab."""
    scores_map = slab_half[:, SCORE_COL]                               # (N,)
    desc_map = slab_half[:, :DESC_DIM]                                 # (N, D)
    top_scores, top_idx = jax.lax.top_k(scores_map, MAX_KPTS)          # (K,)
    xs = (top_idx % W).astype(jnp.float32)
    ys = (top_idx // W).astype(jnp.float32)
    kpts = jnp.stack([xs, ys], axis=-1)                                # (K, 2) (x, y)
    valid = (top_scores > detect_threshold).astype(jnp.float32)        # (K,)
    desc = jnp.take(desc_map, top_idx, axis=0)                         # (K, D)
    return {"keypoints": kpts, "scores": top_scores,
            "descriptors": desc, "valid": valid}


# ----------------------------- API class -------------------------------------
class ImageMatchingAPI:
    default_conf = {
        "cache_size": 100,
        "ransac": {"enable": True, "estimator": "poselib",
                   "geometry": "homography", "method": "RANSAC",
                   "reproj_threshold": 3, "confidence": 0.9999,
                   "max_iter": 10000},
    }

    def __init__(self, conf: dict = {}, device: str = "tpu",
                 detect_threshold: float = 0.015, max_keypoints: int = 1024,
                 match_threshold: float = 0.2) -> None:
        self.device = device
        self.conf = {**self.default_conf, **conf}
        self.detect_threshold = detect_threshold
        self.max_keypoints = min(max_keypoints, MAX_KPTS)
        self.match_threshold = match_threshold
        self.params = self._init_params()
        self._match_fn = make_match_pallas(self.match_threshold)
        self.features_cache = LRUCache(self.conf.get("cache_size"))
        self.pred = None

    def _init_params(self):
        """Deterministic synthetic weights with biases folded in."""
        key = jax.random.PRNGKey(0)
        k1, k2, k3, k4, k5, k6 = jax.random.split(key, 6)
        w_conv = jax.random.normal(k1, (PATCH, HIDDEN), jnp.float32) * 0.3
        b_conv = jax.random.normal(k2, (HIDDEN,), jnp.float32) * 0.05
        wd = jax.random.normal(k3, (HIDDEN, DESC_DIM), jnp.float32) * 0.3
        bd = jax.random.normal(k4, (DESC_DIM,), jnp.float32) * 0.05
        ws = jax.random.normal(k5, (HIDDEN,), jnp.float32) * 0.3
        bs = jax.random.normal(k6, (), jnp.float32) * 0.05

        # conv weights with bias folded into row BIAS_COL; channel HIDDEN is a
        # constant-1 bias channel (relu(1) = 1) feeding the head biases.
        w1 = jnp.zeros((PATCH_PAD, CHANNELS), jnp.float32)
        w1 = w1.at[:PATCH, :HIDDEN].set(w_conv)
        w1 = w1.at[BIAS_COL, :HIDDEN].set(b_conv)
        w1 = w1.at[BIAS_COL, HIDDEN].set(1.0)

        # fused descriptor + score head, padded to 128 output lanes.
        whead = jnp.zeros((CHANNELS, HEAD_OUT), jnp.float32)
        whead = whead.at[:HIDDEN, :DESC_DIM].set(wd)
        whead = whead.at[HIDDEN, :DESC_DIM].set(bd)
        whead = whead.at[:HIDDEN, SCORE_COL].set(ws)
        whead = whead.at[HIDDEN, SCORE_COL].set(bs)
        return (w1, whead)

    # ---- feature extraction (one fused launch for both images) --------------
    def _extract_pair(self, img_a, img_b):
        pa = _rgb_to_patches(jnp.asarray(img_a, jnp.float32))
        pb = _rgb_to_patches(jnp.asarray(img_b, jnp.float32))
        patches2 = jnp.concatenate([pa, pb], axis=0)                   # (2N, 16)
        slab = extract_features_pallas(patches2, *self.params)         # (2N, 128)
        pred_a = _select_keypoints(slab[:N], self.detect_threshold)
        pred_b = _select_keypoints(slab[N:], self.detect_threshold)
        return pred_a, pred_b

    # ---- matching ------------------------------------------------------------
    def _match(self, pred0, pred1):
        d0 = jnp.zeros((KPTS_PAD, DESC_DIM), jnp.float32)
        d0 = d0.at[:MAX_KPTS].set(pred0["descriptors"])
        d1 = jnp.zeros((KPTS_PAD, DESC_DIM), jnp.float32)
        d1 = d1.at[:MAX_KPTS].set(pred1["descriptors"])
        v0 = jnp.zeros((KPTS_PAD, 1), jnp.float32)
        v0 = v0.at[:MAX_KPTS, 0].set(pred0["valid"])
        v1 = jnp.zeros((1, KPTS_PAD), jnp.float32)
        v1 = v1.at[0, :MAX_KPTS].set(pred1["valid"])

        out = self._match_fn(d0, d1, v0, v1)                           # (128, 128)
        match_idx = out[:MAX_KPTS, 0].astype(jnp.int32)                # (K,)
        mconf = out[:MAX_KPTS, 1]                                      # (K,)
        row_mask = out[:MAX_KPTS, 2] > 0.5                             # (K,) bool

        kpts0 = pred0["keypoints"]
        kpts1 = pred1["keypoints"]
        safe_idx = jnp.clip(match_idx, 0, MAX_KPTS - 1)
        mkpts1 = jnp.take(kpts1, safe_idx, axis=0)
        return {
            "keypoints0": kpts0, "keypoints1": kpts1,
            "mkeypoints0": kpts0, "mkeypoints1": mkpts1,
            "mconf": mconf, "match_mask": row_mask,
        }

    def _geometry_check(self, pred):
        # TODO(synk): RANSAC (poselib / cv2 iterative hypothesis-and-verify) has
        # no clean Pallas equivalent; pass raw mutual-NN matches through as inliers.
        pred["mmkeypoints0_orig"] = pred["mkeypoints0_orig"]
        pred["mmkeypoints1_orig"] = pred["mkeypoints1_orig"]
        pred["mmconf"] = pred["mconf"]
        pred["inlier_mask"] = pred["match_mask"]
        return pred

    def forward(self, img0: np.ndarray, img1: np.ndarray,
                name0: str = None, name1: str = None):
        assert isinstance(img0, np.ndarray)
        assert isinstance(img1, np.ndarray)

        pred0 = self.features_cache.get(name0)
        pred1 = self.features_cache.get(name1)
        if pred0 is None and pred1 is None:
            pred0, pred1 = self._extract_pair(img0, img1)     # ONE fused launch
            self.features_cache.put(name0, pred0)
            self.features_cache.put(name1, pred1)
        elif pred0 is None:
            pred0, _ = self._extract_pair(img0, img0)
            self.features_cache.put(name0, pred0)
        elif pred1 is None:
            pred1, _ = self._extract_pair(img1, img1)
            self.features_cache.put(name1, pred1)

        m = self._match(pred0, pred1)

        # original_size / size == 1 here (no preprocessing resize), so the
        # "_orig" keypoints coincide with the extracted ones.
        pred = {
            "image0_orig": jnp.asarray(img0, jnp.float32),
            "image1_orig": jnp.asarray(img1, jnp.float32),
            "keypoints0_orig": m["keypoints0"],
            "keypoints1_orig": m["keypoints1"],
            "mkeypoints0_orig": m["mkeypoints0"],
            "mkeypoints1_orig": m["mkeypoints1"],
            "mconf": m["mconf"],
            "match_mask": m["match_mask"],
        }
        if self.conf["ransac"]["enable"]:
            pred = self._geometry_check(pred)
        self.pred = pred
        return pred

    __call__ = forward


# ----------------------------- main -------------------------------------------
if __name__ == "__main__":
    key = jax.random.PRNGKey(0)
    k0, k1 = jax.random.split(key)
    img0 = jax.random.uniform(k0, (H, W, 3), jnp.float32)
    # img1 = shifted copy of img0 with a little noise -> meaningful matches
    img1 = jnp.roll(img0, shift=2, axis=1)
    img1 = jnp.clip(img1 + 0.02 * jax.random.normal(k1, (H, W, 3), jnp.float32),
                    0.0, 1.0)

    api = ImageMatchingAPI(detect_threshold=0.015, max_keypoints=1024,
                           match_threshold=0.2)
    pred = api.forward(np.asarray(img0), np.asarray(img1),
                       name0="img0", name1="img1")

    for v in pred.values():
        if isinstance(v, jax.Array):
            jax.block_until_ready(v)

    print("KERNEL_OK")
</pallas_src>

<mosaic_0001>
module attributes {stable_mosaic.version = 11 : i64} {
  func.func @_extract_kernel(%arg0: memref<512x16xf32, #tpu.memory_space<vmem>>, %arg1: memref<16x16xf32, #tpu.memory_space<vmem>>, %arg2: memref<16x128xf32, #tpu.memory_space<vmem>>, %arg3: memref<512x128xf32, #tpu.memory_space<vmem>>) attributes {dimension_semantics = [], scalar_prefetch = 0 : i64, scratch_operands = 0 : i64, tpu.core_type = #tpu.core_type<tc>} {
    %c0 = arith.constant 0 : index
    %c0_0 = arith.constant 0 : index
    %0 = vector.load %arg0[%c0, %c0_0] : memref<512x16xf32, #tpu.memory_space<vmem>>, vector<512x16xf32>
    %c0_1 = arith.constant 0 : index
    %c0_2 = arith.constant 0 : index
    %1 = vector.load %arg1[%c0_1, %c0_2] : memref<16x16xf32, #tpu.memory_space<vmem>>, vector<16x16xf32>
    %cst = arith.constant dense<0.000000e+00> : vector<512x16xf32>
    %2 = tpu.matmul %0, %1, %cst {dimension_numbers = #tpu.dot_dimension_numbers<[1], [0], [0], [1], [0, 0, 1, 1], [], []>} : vector<512x16xf32>, vector<16x16xf32>, vector<512x16xf32> -> vector<512x16xf32>
    %cst_3 = arith.constant 0.000000e+00 : f32
    %3 = vector.broadcast %cst_3 : f32 to vector<512x16xf32>
    %4 = arith.maximumf %2, %3 : vector<512x16xf32>
    %c0_4 = arith.constant 0 : index
    %c0_5 = arith.constant 0 : index
    %5 = vector.load %arg2[%c0_4, %c0_5] : memref<16x128xf32, #tpu.memory_space<vmem>>, vector<16x128xf32>
    %cst_6 = arith.constant dense<0.000000e+00> : vector<512x128xf32>
    %6 = tpu.matmul %4, %5, %cst_6 {dimension_numbers = #tpu.dot_dimension_numbers<[1], [0], [0], [1], [0, 0, 1, 1], [], []>} : vector<512x16xf32>, vector<16x128xf32>, vector<512x128xf32> -> vector<512x128xf32>
    %7 = tpu.iota {dimensions = array<i32: 1>} : vector<512x128xi32>
    %c32_i32 = arith.constant 32 : i32
    %8 = vector.broadcast %c32_i32 : i32 to vector<512x128xi32>
    %9 = arith.cmpi slt, %7, %8 : vector<512x128xi32>
    %c32_i32_7 = arith.constant 32 : i32
    %10 = vector.broadcast %c32_i32_7 : i32 to vector<512x128xi32>
    %11 = arith.cmpi eq, %7, %10 : vector<512x128xi32>
    %cst_8 = arith.constant 0.000000e+00 : f32
    %12 = vector.broadcast %cst_8 : f32 to vector<512x128xf32>
    %13 = arith.select %9, %6, %12 : vector<512x128xi1>, vector<512x128xf32>
    %14 = arith.mulf %13, %13 : vector<512x128xf32>
    %cst_9 = arith.constant dense<0.000000e+00> : vector<512xf32>
    %15 = vector.multi_reduction <add>, %14, %cst_9 [1] : vector<512x128xf32> to vector<512xf32>
    %16 = vector.shape_cast %15 : vector<512xf32> to vector<512x1xf32>
    %cst_10 = arith.constant 9.99999996E-13 : f32
    %17 = vector.broadcast %cst_10 : f32 to vector<512x1xf32>
    %18 = arith.addf %16, %17 : vector<512x1xf32>
    %19 = math.rsqrt %18 : vector<512x1xf32>
    %20 = arith.negf %6 : vector<512x128xf32>
    %21 = math.exp %20 : vector<512x128xf32>
    %cst_11 = arith.constant 1.000000e+00 : f32
    %22 = vector.broadcast %cst_11 : f32 to vector<512x128xf32>
    %23 = arith.addf %22, %21 : vector<512x128xf32>
    %24 = arith.divf %22, %23 : vector<512x128xf32>
    %25 = vector.broadcast %19 : vector<512x1xf32> to vector<512x128xf32>
    %26 = arith.mulf %6, %25 : vector<512x128xf32>
    %cst_12 = arith.constant 0.000000e+00 : f32
    %27 = vector.broadcast %cst_12 : f32 to vector<512x128xf32>
    %28 = arith.select %11, %24, %27 : vector<512x128xi1>, vector<512x128xf32>
    %29 = arith.select %9, %26, %28 : vector<512x128xi1>, vector<512x128xf32>
    %c0_13 = arith.constant 0 : index
    %c0_14 = arith.constant 0 : index
    %30 = vector.load %arg3[%c0_13, %c0_14] : memref<512x128xf32, #tpu.memory_space<vmem>>, vector<512x128xf32>
    tpu.vector_store %arg3[%c0_13, %c0_14], %29 {strides = array<i32>} : memref<512x128xf32, #tpu.memory_space<vmem>>, vector<512x128xf32>,
    return
  }
}

</mosaic_0001>

<llo_original>
// kernel: tpu_custom_call.1
$region0: #{tpu_custom_call.1}
  #allocation0 [shape = 'u32[]', space=smem, size = 0x4, offset = 0x4, fixed_abs, tag = 'smem constant byte address 0x4 - core index']
  #allocation1 [shape = 'u32[144,128]{1,0:T(1,128)}', space=vmem, size = 0x12000, scoped, tag = 'internal scratch']
  %s0 = inlined_call_operand.vmem [shape: f32[512,16], index: 0, kind: input, shape index: {}]
  %s1 = inlined_call_operand.vmem [shape: f32[16,16], index: 1, kind: input, shape index: {}]
  %s2 = inlined_call_operand.vmem [shape: f32[16,128], index: 2, kind: input, shape index: {}]
  %s3 = inlined_call_operand.hbm [shape: f32[512,128], index: 3, kind: output, shape index: {}]
  %s4 = sld [smem:[#allocation0]]
  $region22: #{tpu_custom_call.1} parent=0
    _
  %s6 = ssub.s32 1, %s4
  %s7 = scalar_select 0, %s6, %s4
  $region1: #{tpu_custom_call.1} parent=0
    #allocation2 [shape = 'u8[262144]{0}', space=vmem, size = 0x40000, scoped, tag = 'output window, operand 0, single buffered']
    #allocation3 [shape = 's32[1]{0}', space=sflag, size = 0x4, scoped, tag = 'scoped memory for tpu_custom_call.1']
    %8 = vsyncpa [#allocation3], 0
    // Predicated region
    $region2: #{tpu_custom_call.1} parent=1 // pred_check
      _
    $region3: #{tpu_custom_call.1} parent=1 // pred_check_branch
      %10 = sbr.rel (0) target = $region5
    $region4: #{tpu_custom_call.1} parent=1 // pred_region
      _
    $region5: #{tpu_custom_call.1} parent=1 // pred_fallthru
      _
    // Predicated region
    $region6: #{tpu_custom_call.1} parent=1 // pred_check
      _
    $region7: #{tpu_custom_call.1} parent=1 // pred_check_branch
      %12 = sbr.rel (0) target = $region9
    $region8: #{tpu_custom_call.1} parent=1 // pred_region
      _
    $region9: #{tpu_custom_call.1} parent=1 // pred_fallthru
      _
    // Predicated region
    $region10: #{tpu_custom_call.1} parent=1 // pred_check
      _
    $region11: #{tpu_custom_call.1} parent=1 // pred_check_branch
      %14 = sbr.rel (0) target = $region13
    $region12: #{tpu_custom_call.1} parent=1 // pred_region
      _
    $region13: #{tpu_custom_call.1} parent=1 // pred_fallthru
      _
    %v15 = vld [vmem:[%s0] sm:$0xff]
    %v16 = vld [vmem:[%s0 + $0x8] sm:$0xff]
    %v17 = vld [vmem:[%s0 + $0x10] sm:$0xff]
    %v18 = vld [vmem:[%s0 + $0x18] sm:$0xff]
    %v19 = vld [vmem:[%s0 + $0x20] sm:$0xff]
    %v20 = vld [vmem:[%s0 + $0x28] sm:$0xff]
    %v21 = vld [vmem:[%s0 + $0x30] sm:$0xff]
    %v22 = vld [vmem:[%s0 + $0x38] sm:$0xff]
    %v23 = vld [vmem:[%s0 + $0x40] sm:$0xff]
    %v24 = vld [vmem:[%s0 + $0x48] sm:$0xff]
    %v25 = vld [vmem:[%s0 + $0x50] sm:$0xff]
    %v26 = vld [vmem:[%s0 + $0x58] sm:$0xff]
    %v27 = vld [vmem:[%s0 + $0x60] sm:$0xff]
    %v28 = vld [vmem:[%s0 + $0x68] sm:$0xff]
    %v29 = vld [vmem:[%s0 + $0x70] sm:$0xff]
    %v30 = vld [vmem:[%s0 + $0x78] sm:$0xff]
    %v31 = vld [vmem:[%s0 + $0x80] sm:$0xff]
    %v32 = vld [vmem:[%s0 + $0x88] sm:$0xff]
    %v33 = vld [vmem:[%s0 + $0x90] sm:$0xff]
    %v34 = vld [vmem:[%s0 + $0x98] sm:$0xff]
    %v35 = vld [vmem:[%s0 + $0xa0] sm:$0xff]
    %v36 = vld [vmem:[%s0 + $0xa8] sm:$0xff]
    %v37 = vld [vmem:[%s0 + $0xb0] sm:$0xff]
    %v38 = vld [vmem:[%s0 + $0xb8] sm:$0xff]
    %v39 = vld [vmem:[%s0 + $0xc0] sm:$0xff]
    %v40 = vld [vmem:[%s0 + $0xc8] sm:$0xff]
    %v41 = vld [vmem:[%s0 + $0xd0] sm:$0xff]
    %v42 = vld [vmem:[%s0 + $0xd8] sm:$0xff]
    %v43 = vld [vmem:[%s0 + $0xe0] sm:$0xff]
    %v44 = vld [vmem:[%s0 + $0xe8] sm:$0xff]
    %v45 = vld [vmem:[%s0 + $0xf0] sm:$0xff]
    %v46 = vld [vmem:[%s0 + $0xf8] sm:$0xff]
    %v47 = vld [vmem:[%s0 + $0x100] sm:$0xff]
    %v48 = vld [vmem:[%s0 + $0x108] sm:$0xff]
    %v49 = vld [vmem:[%s0 + $0x110] sm:$0xff]
    %v50 = vld [vmem:[%s0 + $0x118] sm:$0xff]
    %v51 = vld [vmem:[%s0 + $0x120] sm:$0xff]
    %v52 = vld [vmem:[%s0 + $0x128] sm:$0xff]
    %v53 = vld [vmem:[%s0 + $0x130] sm:$0xff]
    %v54 = vld [vmem:[%s0 + $0x138] sm:$0xff]
    %v55 = vld [vmem:[%s0 + $0x140] sm:$0xff]
    %v56 = vld [vmem:[%s0 + $0x148] sm:$0xff]
    %v57 = vld [vmem:[%s0 + $0x150] sm:$0xff]
    %v58 = vld [vmem:[%s0 + $0x158] sm:$0xff]
    %v59 = vld [vmem:[%s0 + $0x160] sm:$0xff]
    %v60 = vld [vmem:[%s0 + $0x168] sm:$0xff]
    %v61 = vld [vmem:[%s0 + $0x170] sm:$0xff]
    %v62 = vld [vmem:[%s0 + $0x178] sm:$0xff]
    %v63 = vld [vmem:[%s0 + $0x180] sm:$0xff]
    %v64 = vld [vmem:[%s0 + $0x188] sm:$0xff]
    %v65 = vld [vmem:[%s0 + $0x190] sm:$0xff]
    %v66 = vld [vmem:[%s0 + $0x198] sm:$0xff]
    %v67 = vld [vmem:[%s0 + $0x1a0] sm:$0xff]
    %v68 = vld [vmem:[%s0 + $0x1a8] sm:$0xff]
    %v69 = vld [vmem:[%s0 + $0x1b0] sm:$0xff]
    %v70 = vld [vmem:[%s0 + $0x1b8] sm:$0xff]
    %v71 = vld [vmem:[%s0 + $0x1c0] sm:$0xff]
    %v72 = vld [vmem:[%s0 + $0x1c8] sm:$0xff]
    %v73 = vld [vmem:[%s0 + $0x1d0] sm:$0xff]
    %v74 = vld [vmem:[%s0 + $0x1d8] sm:$0xff]
    %v75 = vld [vmem:[%s0 + $0x1e0] sm:$0xff]
    %v76 = vld [vmem:[%s0 + $0x1e8] sm:$0xff]
    %v77 = vld [vmem:[%s0 + $0x1f0] sm:$0xff]
    %v78 = vld [vmem:[%s0 + $0x1f8] sm:$0xff]
    %v79 = vld [vmem:[%s1] sm:$0xff]
    %v80 = vld [vmem:[%s1 + $0x8] sm:$0xff]
    %vm81 = vcmask 130048
    %v83 = vsel %vm81, %v15, 0
    %v86 = vsel %vm81, %v16, 0
    %v89 = vsel %vm81, %v17, 0
    %v92 = vsel %vm81, %v18, 0
    %v95 = vsel %vm81, %v19, 0
    %v98 = vsel %vm81, %v20, 0
    %v101 = vsel %vm81, %v21, 0
    %v104 = vsel %vm81, %v22, 0
    %v107 = vsel %vm81, %v23, 0
    %v110 = vsel %vm81, %v24, 0
    %v113 = vsel %vm81, %v25, 0
    %v116 = vsel %vm81, %v26, 0
    %v119 = vsel %vm81, %v27, 0
    %v122 = vsel %vm81, %v28, 0
    %v125 = vsel %vm81, %v29, 0
    %v128 = vsel %vm81, %v30, 0
    %v131 = vsel %vm81, %v31, 0
    %v134 = vsel %vm81, %v32, 0
    %v137 = vsel %vm81, %v33, 0
    %v140 = vsel %vm81, %v34, 0
    %v143 = vsel %vm81, %v35, 0
    %v146 = vsel %vm81, %v36, 0
    %v149 = vsel %vm81, %v37, 0
    %v152 = vsel %vm81, %v38, 0
    %v155 = vsel %vm81, %v39, 0
    %v158 = vsel %vm81, %v40, 0
    %v161 = vsel %vm81, %v41, 0
    %v164 = vsel %vm81, %v42, 0
    %v167 = vsel %vm81, %v43, 0
    %v170 = vsel %vm81, %v44, 0
    %v173 = vsel %vm81, %v45, 0
    %v176 = vsel %vm81, %v46, 0
    %v179 = vsel %vm81, %v47, 0
    %v182 = vsel %vm81, %v48, 0
    %v185 = vsel %vm81, %v49, 0
    %v188 = vsel %vm81, %v50, 0
    %v191 = vsel %vm81, %v51, 0
    %v194 = vsel %vm81, %v52, 0
    %v197 = vsel %vm81, %v53, 0
    %v200 = vsel %vm81, %v54, 0
    %v203 = vsel %vm81, %v55, 0
    %v206 = vsel %vm81, %v56, 0
    %v209 = vsel %vm81, %v57, 0
    %v212 = vsel %vm81, %v58, 0
    %v215 = vsel %vm81, %v59, 0
    %v218 = vsel %vm81, %v60, 0
    %v221 = vsel %vm81, %v61, 0
    %v224 = vsel %vm81, %v62, 0
    %v227 = vsel %vm81, %v63, 0
    %v230 = vsel %vm81, %v64, 0
    %v233 = vsel %vm81, %v65, 0
    %v236 = vsel %vm81, %v66, 0
    %v239 = vsel %vm81, %v67, 0
    %v242 = vsel %vm81, %v68, 0
    %v245 = vsel %vm81, %v69, 0
    %v248 = vsel %vm81, %v70, 0
    %v251 = vsel %vm81, %v71, 0
    %v254 = vsel %vm81, %v72, 0
    %v257 = vsel %vm81, %v73, 0
    %v260 = vsel %vm81, %v74, 0
    %v263 = vsel %vm81, %v75, 0
    %v266 = vsel %vm81, %v76, 0
    %v269 = vsel %vm81, %v77, 0
    %v272 = vsel %vm81, %v78, 0
    %274 = vmatprep.subr.mxu0 0.0
    %275 = vmatpush1.msra.mxu0 0.0
    %276 = vmatprep.subr.mxu0 0.0
    %277 = vmatpush1.msra.mxu0 0.0
    %278 = vmatprep.subr.mxu0 0.0
    %279 = vmatpush1.msra.mxu0 0.0
    %280 = vmatprep.subr.mxu0 0.0
    %281 = vmatpush1.msra.mxu0 0.0
    %282 = vmatprep.subr.mxu0 0.0
    %283 = vmatpush1.msra.mxu0 0.0
    %284 = vmatprep.subr.mxu0 0.0
    %285 = vmatpush1.msra.mxu0 0.0
    %286 = vmatprep.subr.mxu0 0.0
    %287 = vmatpush1.msra.mxu0 0.0
    %288 = vmatprep.subr.mxu0 0.0
    %289 = vmatpush1.msra.mxu0 0.0
    %290 = vmatprep.subr.mxu0 0.0
    %291 = vmatpush1.msra.mxu0 0.0
    %292 = vmatprep.subr.mxu0 0.0
    %293 = vmatpush1.msra.mxu0 0.0
    %294 = vmatprep.subr.mxu0 0.0
    %295 = vmatpush1.msra.mxu0 0.0
    %296 = vmatprep.subr.mxu0 0.0
    %297 = vmatpush1.msra.mxu0 0.0
    %298 = vmatprep.subr.mxu0 0.0
    %299 = vmatpush1.msra.mxu0 0.0
    %300 = vmatprep.subr.mxu0 0.0
    %301 = vmatpush1.msra.mxu0 0.0
    %302 = vmatprep.subr.mxu0 0.0
    %303 = vmatpush1.msra.mxu0 %v80
    %304 = vmatprep.subr.mxu0 0.0
    %305 = vmatpush1.msra.mxu0 %v79
    %306 = vmatprep.subr.mxu0 0.0
    %307 = vmatpush2.msra.mxu0 0.0
    %308 = vmatprep.subr.mxu0 0.0
    %309 = vmatpush2.msra.mxu0 0.0
    %310 = vmatprep.subr.mxu0 0.0
    %311 = vmatpush2.msra.mxu0 0.0
    %312 = vmatprep.subr.mxu0 0.0
    %313 = vmatpush2.msra.mxu0 0.0
    %314 = vmatprep.subr.mxu0 0.0
    %315 = vmatpush2.msra.mxu0 0.0
    %316 = vmatprep.subr.mxu0 0.0
    %317 = vmatpush2.msra.mxu0 0.0
    %318 = vmatprep.subr.mxu0 0.0
    %319 = vmatpush2.msra.mxu0 0.0
    %320 = vmatprep.subr.mxu0 0.0
    %321 = vmatpush2.msra.mxu0 0.0
    %322 = vmatprep.subr.mxu0 0.0
    %323 = vmatpush2.msra.mxu0 0.0
    %324 = vmatprep.subr.mxu0 0.0
    %325 = vmatpush2.msra.mxu0 0.0
    %326 = vmatprep.subr.mxu0 0.0
    %327 = vmatpush2.msra.mxu0 0.0
    %328 = vmatprep.subr.mxu0 0.0
    %329 = vmatpush2.msra.mxu0 0.0
    %330 = vmatprep.subr.mxu0 0.0
    %331 = vmatpush2.msra.mxu0 0.0
    %332 = vmatprep.subr.mxu0 0.0
    %333 = vmatpush2.msra.mxu0 0.0
    %334 = vmatprep.subr.mxu0 0.0
    %335 = vmatpush2.msra.mxu0 0.0
    %336 = vmatprep.subr.mxu0 0.0
    %337 = vmatpush2.msra.mxu0 0.0
    %338 = vmatprep.mubr.f32.mxu0 0.0
    %339 = vmatmul.mubr.f32.gmra.mxu0 %v83
    %v340 = vpop.f32.mrf.mxu0
    %v341 = vadd.f32 0.0, %v340
    %v342 = vpop.f32.mrf.mxu0
    %343 = vmatprep.mubr.f32.mxu0 0.0
    %344 = vmatmul.mubr.f32.gmra.mxu0 %v86
    %v345 = vpop.f32.mrf.mxu0
    %v346 = vadd.f32 0.0, %v345
    %v347 = vpop.f32.mrf.mxu0
    %348 = vmatprep.mubr.f32.mxu0 0.0
    %349 = vmatmul.mubr.f32.gmra.mxu0 %v89
    %v350 = vpop.f32.mrf.mxu0
    %v351 = vadd.f32 0.0, %v350
    %v352 = vpop.f32.mrf.mxu0
    %353 = vmatprep.mubr.f32.mxu0 0.0
    %354 = vmatmul.mubr.f32.gmra.mxu0 %v92
    %v355 = vpop.f32.mrf.mxu0
    %v356 = vadd.f32 0.0, %v355
    %v357 = vpop.f32.mrf.mxu0
    %358 = vmatprep.mubr.f32.mxu0 0.0
    %359 = vmatmul.mubr.f32.gmra.mxu0 %v95
    %v360 = vpop.f32.mrf.mxu0
    %v361 = vadd.f32 0.0, %v360
    %v362 = vpop.f32.mrf.mxu0
    %363 = vmatprep.mubr.f32.mxu0 0.0
    %364 = vmatmul.mubr.f32.gmra.mxu0 %v98
    %v365 = vpop.f32.mrf.mxu0
    %v366 = vadd.f32 0.0, %v365
    %v367 = vpop.f32.mrf.mxu0
    %368 = vmatprep.mubr.f32.mxu0 0.0
    %369 = vmatmul.mubr.f32.gmra.mxu0 %v101
    %v370 = vpop.f32.mrf.mxu0
    %v371 = vadd.f32 0.0, %v370
    %v372 = vpop.f32.mrf.mxu0
    %373 = vmatprep.mubr.f32.mxu0 0.0
    %374 = vmatmul.mubr.f32.gmra.mxu0 %v104
    %v375 = vpop.f32.mrf.mxu0
    %v376 = vadd.f32 0.0, %v375
    %v377 = vpop.f32.mrf.mxu0
    %378 = vmatprep.mubr.f32.mxu0 0.0
    %379 = vmatmul.mubr.f32.gmra.mxu0 %v107
    %v380 = vpop.f32.mrf.mxu0
    %v381 = vadd.f32 0.0, %v380
    %v382 = vpop.f32.mrf.mxu0
    %383 = vmatprep.mubr.f32.mxu0 0.0
    %384 = vmatmul.mubr.f32.gmra.mxu0 %v110
    %v385 = vpop.f32.mrf.mxu0
    %v386 = vadd.f32 0.0, %v385
    %v387 = vpop.f32.mrf.mxu0
    %388 = vmatprep.mubr.f32.mxu0 0.0
    %389 = vmatmul.mubr.f32.gmra.mxu0 %v113
    %v390 = vpop.f32.mrf.mxu0
    %v391 = vadd.f32 0.0, %v390
    %v392 = vpop.f32.mrf.mxu0
    %393 = vmatprep.mubr.f32.mxu0 0.0
    %394 = vmatmul.mubr.f32.gmra.mxu0 %v116
    %v395 = vpop.f32.mrf.mxu0
    %v396 = vadd.f32 0.0, %v395
    %v397 = vpop.f32.mrf.mxu0
    %398 = vmatprep.mubr.f32.mxu0 0.0
    %399 = vmatmul.mubr.f32.gmra.mxu0 %v119
    %v400 = vpop.f32.mrf.mxu0
    %v401 = vadd.f32 0.0, %v400
    %v402 = vpop.f32.mrf.mxu0
    %403 = vmatprep.mubr.f32.mxu0 0.0
    %404 = vmatmul.mubr.f32.gmra.mxu0 %v122
    %v405 = vpop.f32.mrf.mxu0
    %v406 = vadd.f32 0.0, %v405
    %v407 = vpop.f32.mrf.mxu0
    %408 = vmatprep.mubr.f32.mxu0 0.0
    %409 = vmatmul.mubr.f32.gmra.mxu0 %v125
    %v410 = vpop.f32.mrf.mxu0
    %v411 = vadd.f32 0.0, %v410
    %v412 = vpop.f32.mrf.mxu0
    %413 = vmatprep.mubr.f32.mxu0 0.0
    %414 = vmatmul.mubr.f32.gmra.mxu0 %v128
    %v415 = vpop.f32.mrf.mxu0
    %v416 = vadd.f32 0.0, %v415
    %v417 = vpop.f32.mrf.mxu0
    %418 = vmatprep.mubr.f32.mxu0 0.0
    %419 = vmatmul.mubr.f32.gmra.mxu0 %v131
    %v420 = vpop.f32.mrf.mxu0
    %v421 = vadd.f32 0.0, %v420
    %v422 = vpop.f32.mrf.mxu0
    %423 = vmatprep.mubr.f32.mxu0 0.0
    %424 = vmatmul.mubr.f32.gmra.mxu0 %v134
    %v425 = vpop.f32.mrf.mxu0
    %v426 = vadd.f32 0.0, %v425
    %v427 = vpop.f32.mrf.mxu0
    %428 = vmatprep.mubr.f32.mxu0 0.0
    %429 = vmatmul.mubr.f32.gmra.mxu0 %v137
    %v430 = vpop.f32.mrf.mxu0
    %v431 = vadd.f32 0.0, %v430
    %v432 = vpop.f32.mrf.mxu0
    %433 = vmatprep.mubr.f32.mxu0 0.0
    %434 = vmatmul.mubr.f32.gmra.mxu0 %v140
    %v435 = vpop.f32.mrf.mxu0
    %v436 = vadd.f32 0.0, %v435
    %v437 = vpop.f32.mrf.mxu0
    %438 = vmatprep.mubr.f32.mxu0 0.0
    %439 = vmatmul.mubr.f32.gmra.mxu0 %v143
    %v440 = vpop.f32.mrf.mxu0
    %v441 = vadd.f32 0.0, %v440
    %v442 = vpop.f32.mrf.mxu0
    %443 = vmatprep.mubr.f32.mxu0 0.0
    %444 = vmatmul.mubr.f32.gmra.mxu0 %v146
    %v445 = vpop.f32.mrf.mxu0
    %v446 = vadd.f32 0.0, %v445
    %v447 = vpop.f32.mrf.mxu0
    %448 = vmatprep.mubr.f32.mxu0 0.0
    %449 = vmatmul.mubr.f32.gmra.mxu0 %v149
    %v450 = vpop.f32.mrf.mxu0
    %v451 = vadd.f32 0.0, %v450
    %v452 = vpop.f32.mrf.mxu0
    %453 = vmatprep.mubr.f32.mxu0 0.0
    %454 = vmatmul.mubr.f32.gmra.mxu0 %v152
    %v455 = vpop.f32.mrf.mxu0
    %v456 = vadd.f32 0.0, %v455
    %v457 = vpop.f32.mrf.mxu0
    %458 = vmatprep.mubr.f32.mxu0 0.0
    %459 = vmatmul.mubr.f32.gmra.mxu0 %v155
    %v460 = vpop.f32.mrf.mxu0
    %v461 = vadd.f32 0.0, %v460
    %v462 = vpop.f32.mrf.mxu0
    %463 = vmatprep.mubr.f32.mxu0 0.0
    %464 = vmatmul.mubr.f32.gmra.mxu0 %v158
    %v465 = vpop.f32.mrf.mxu0
    %v466 = vadd.f32 0.0, %v465
    %v467 = vpop.f32.mrf.mxu0
    %468 = vmatprep.mubr.f32.mxu0 0.0
    %469 = vmatmul.mubr.f32.gmra.mxu0 %v161
    %v470 = vpop.f32.mrf.mxu0
    %v471 = vadd.f32 0.0, %v470
    %v472 = vpop.f32.mrf.mxu0
    %473 = vmatprep.mubr.f32.mxu0 0.0
    %474 = vmatmul.mubr.f32.gmra.mxu0 %v164
    %v475 = vpop.f32.mrf.mxu0
    %v476 = vadd.f32 0.0, %v475
    %v477 = vpop.f32.mrf.mxu0
    %478 = vmatprep.mubr.f32.mxu0 0.0
    %479 = vmatmul.mubr.f32.gmra.mxu0 %v167
    %v480 = vpop.f32.mrf.mxu0
    %v481 = vadd.f32 0.0, %v480
    %v482 = vpop.f32.mrf.mxu0
    %483 = vmatprep.mubr.f32.mxu0 0.0
    %484 = vmatmul.mubr.f32.gmra.mxu0 %v170
    %v485 = vpop.f32.mrf.mxu0
    %v486 = vadd.f32 0.0, %v485
    %v487 = vpop.f32.mrf.mxu0
    %488 = vmatprep.mubr.f32.mxu0 0.0
    %489 = vmatmul.mubr.f32.gmra.mxu0 %v173
    %v490 = vpop.f32.mrf.mxu0
    %v491 = vadd.f32 0.0, %v490
    %v492 = vpop.f32.mrf.mxu0
    %493 = vmatprep.mubr.f32.mxu0 0.0
    %494 = vmatmul.mubr.f32.gmra.mxu0 %v176
    %v495 = vpop.f32.mrf.mxu0
    %v496 = vadd.f32 0.0, %v495
    %v497 = vpop.f32.mrf.mxu0
    %498 = vmatprep.mubr.f32.mxu0 0.0
    %499 = vmatmul.mubr.f32.gmra.mxu0 %v179
    %v500 = vpop.f32.mrf.mxu0
    %v501 = vadd.f32 0.0, %v500
    %v502 = vpop.f32.mrf.mxu0
    %503 = vmatprep.mubr.f32.mxu0 0.0
    %504 = vmatmul.mubr.f32.gmra.mxu0 %v182
    %v505 = vpop.f32.mrf.mxu0
    %v506 = vadd.f32 0.0, %v505
    %v507 = vpop.f32.mrf.mxu0
    %508 = vmatprep.mubr.f32.mxu0 0.0
    %509 = vmatmul.mubr.f32.gmra.mxu0 %v185
    %v510 = vpop.f32.mrf.mxu0
    %v511 = vadd.f32 0.0, %v510
    %v512 = vpop.f32.mrf.mxu0
    %513 = vmatprep.mubr.f32.mxu0 0.0
    %514 = vmatmul.mubr.f32.gmra.mxu0 %v188
    %v515 = vpop.f32.mrf.mxu0
    %v516 = vadd.f32 0.0, %v515
    %v517 = vpop.f32.mrf.mxu0
    %518 = vmatprep.mubr.f32.mxu0 0.0
    %519 = vmatmul.mubr.f32.gmra.mxu0 %v191
    %v520 = vpop.f32.mrf.mxu0
    %v521 = vadd.f32 0.0, %v520
    %v522 = vpop.f32.mrf.mxu0
    %523 = vmatprep.mubr.f32.mxu0 0.0
    %524 = vmatmul.mubr.f32.gmra.mxu0 %v194
    %v525 = vpop.f32.mrf.mxu0
    %v526 = vadd.f32 0.0, %v525
    %v527 = vpop.f32.mrf.mxu0
    %528 = vmatprep.mubr.f32.mxu0 0.0
    %529 = vmatmul.mubr.f32.gmra.mxu0 %v197
    %v530 = vpop.f32.mrf.mxu0
    %v531 = vadd.f32 0.0, %v530
    %v532 = vpop.f32.mrf.mxu0
    %533 = vmatprep.mubr.f32.mxu0 0.0
    %534 = vmatmul.mubr.f32.gmra.mxu0 %v200
    %v535 = vpop.f32.mrf.mxu0
    %v536 = vadd.f32 0.0, %v535
    %v537 = vpop.f32.mrf.mxu0
    %538 = vmatprep.mubr.f32.mxu0 0.0
    %539 = vmatmul.mubr.f32.gmra.mxu0 %v203
    %v540 = vpop.f32.mrf.mxu0
    %v541 = vadd.f32 0.0, %v540
    %v542 = vpop.f32.mrf.mxu0
    %543 = vmatprep.mubr.f32.mxu0 0.0
    %544 = vmatmul.mubr.f32.gmra.mxu0 %v206
    %v545 = vpop.f32.mrf.mxu0
    %v546 = vadd.f32 0.0, %v545
    %v547 = vpop.f32.mrf.mxu0
    %548 = vmatprep.mubr.f32.mxu0 0.0
    %549 = vmatmul.mubr.f32.gmra.mxu0 %v209
    %v550 = vpop.f32.mrf.mxu0
    %v551 = vadd.f32 0.0, %v550
    %v552 = vpop.f32.mrf.mxu0
    %553 = vmatprep.mubr.f32.mxu0 0.0
    %554 = vmatmul.mubr.f32.gmra.mxu0 %v212
    %v555 = vpop.f32.mrf.mxu0
    %v556 = vadd.f32 0.0, %v555
    %v557 = vpop.f32.mrf.mxu0
    %558 = vmatprep.mubr.f32.mxu0 0.0
    %559 = vmatmul.mubr.f32.gmra.mxu0 %v215
    %v560 = vpop.f32.mrf.mxu0
    %v561 = vadd.f32 0.0, %v560
    %v562 = vpop.f32.mrf.mxu0
    %563 = vmatprep.mubr.f32.mxu0 0.0
    %564 = vmatmul.mubr.f32.gmra.mxu0 %v218
    %v565 = vpop.f32.mrf.mxu0
    %v566 = vadd.f32 0.0, %v565
    %v567 = vpop.f32.mrf.mxu0
    %568 = vmatprep.mubr.f32.mxu0 0.0
    %569 = vmatmul.mubr.f32.gmra.mxu0 %v221
    %v570 = vpop.f32.mrf.mxu0
    %v571 = vadd.f32 0.0, %v570
    %v572 = vpop.f32.mrf.mxu0
    %573 = vmatprep.mubr.f32.mxu0 0.0
    %574 = vmatmul.mubr.f32.gmra.mxu0 %v224
    %v575 = vpop.f32.mrf.mxu0
    %v576 = vadd.f32 0.0, %v575
    %v577 = vpop.f32.mrf.mxu0
    %578 = vmatprep.mubr.f32.mxu0 0.0
    %579 = vmatmul.mubr.f32.gmra.mxu0 %v227
    %v580 = vpop.f32.mrf.mxu0
    %v581 = vadd.f32 0.0, %v580
    %v582 = vpop.f32.mrf.mxu0
    %583 = vmatprep.mubr.f32.mxu0 0.0
    %584 = vmatmul.mubr.f32.gmra.mxu0 %v230
    %v585 = vpop.f32.mrf.mxu0
    %v586 = vadd.f32 0.0, %v585
    %v587 = vpop.f32.mrf.mxu0
    %588 = vmatprep.mubr.f32.mxu0 0.0
    %589 = vmatmul.mubr.f32.gmra.mxu0 %v233
    %v590 = vpop.f32.mrf.mxu0
    %v591 = vadd.f32 0.0, %v590
    %v592 = vpop.f32.mrf.mxu0
    %593 = vmatprep.mubr.f32.mxu0 0.0
    %594 = vmatmul.mubr.f32.gmra.mxu0 %v236
    %v595 = vpop.f32.mrf.mxu0
    %v596 = vadd.f32 0.0, %v595
    %v597 = vpop.f32.mrf.mxu0
    %598 = vmatprep.mubr.f32.mxu0 0.0
    %599 = vmatmul.mubr.f32.gmra.mxu0 %v239
    %v600 = vpop.f32.mrf.mxu0
    %v601 = vadd.f32 0.0, %v600
    %v602 = vpop.f32.mrf.mxu0
    %603 = vmatprep.mubr.f32.mxu0 0.0
    %604 = vmatmul.mubr.f32.gmra.mxu0 %v242
    %v605 = vpop.f32.mrf.mxu0
    %v606 = vadd.f32 0.0, %v605
    %v607 = vpop.f32.mrf.mxu0
    %608 = vmatprep.mubr.f32.mxu0 0.0
    %609 = vmatmul.mubr.f32.gmra.mxu0 %v245
    %v610 = vpop.f32.mrf.mxu0
    %v611 = vadd.f32 0.0, %v610
    %v612 = vpop.f32.mrf.mxu0
    %613 = vmatprep.mubr.f32.mxu0 0.0
    %614 = vmatmul.mubr.f32.gmra.mxu0 %v248
    %v615 = vpop.f32.mrf.mxu0
    %v616 = vadd.f32 0.0, %v615
    %v617 = vpop.f32.mrf.mxu0
    %618 = vmatprep.mubr.f32.mxu0 0.0
    %619 = vmatmul.mubr.f32.gmra.mxu0 %v251
    %v620 = vpop.f32.mrf.mxu0
    %v621 = vadd.f32 0.0, %v620
    %v622 = vpop.f32.mrf.mxu0
    %623 = vmatprep.mubr.f32.mxu0 0.0
    %624 = vmatmul.mubr.f32.gmra.mxu0 %v254
    %v625 = vpop.f32.mrf.mxu0
    %v626 = vadd.f32 0.0, %v625
    %v627 = vpop.f32.mrf.mxu0
    %628 = vmatprep.mubr.f32.mxu0 0.0
    %629 = vmatmul.mubr.f32.gmra.mxu0 %v257
    %v630 = vpop.f32.mrf.mxu0
    %v631 = vadd.f32 0.0, %v630
    %v632 = vpop.f32.mrf.mxu0
    %633 = vmatprep.mubr.f32.mxu0 0.0
    %634 = vmatmul.mubr.f32.gmra.mxu0 %v260
    %v635 = vpop.f32.mrf.mxu0
    %v636 = vadd.f32 0.0, %v635
    %v637 = vpop.f32.mrf.mxu0
    %638 = vmatprep.mubr.f32.mxu0 0.0
    %639 = vmatmul.mubr.f32.gmra.mxu0 %v263
    %v640 = vpop.f32.mrf.mxu0
    %v641 = vadd.f32 0.0, %v640
    %v642 = vpop.f32.mrf.mxu0
    %643 = vmatprep.mubr.f32.mxu0 0.0
    %644 = vmatmul.mubr.f32.gmra.mxu0 %v266
    %v645 = vpop.f32.mrf.mxu0
    %v646 = vadd.f32 0.0, %v645
    %v647 = vpop.f32.mrf.mxu0
    %648 = vmatprep.mubr.f32.mxu0 0.0
    %649 = vmatmul.mubr.f32.gmra.mxu0 %v269
    %v650 = vpop.f32.mrf.mxu0
    %v651 = vadd.f32 0.0, %v650
    %v652 = vpop.f32.mrf.mxu0
    %653 = vmatprep.mubr.f32.mxu0 0.0
    %654 = vmatmul.mubr.f32.gmra.mxu0 %v272
    %v655 = vpop.f32.mrf.mxu0
    %v656 = vadd.f32 0.0, %v655
    %v657 = vpop.f32.mrf.mxu0
    %658 = vdwg.mxu0
    %v659 = vmax.f32 %v341, 0.0
    %v660 = vmax.f32 %v346, 0.0
    %v661 = vmax.f32 %v351, 0.0
    %v662 = vmax.f32 %v356, 0.0
    %v663 = vmax.f32 %v361, 0.0
    %v664 = vmax.f32 %v366, 0.0
    %v665 = vmax.f32 %v371, 0.0
    %v666 = vmax.f32 %v376, 0.0
    %v667 = vmax.f32 %v381, 0.0
    %v668 = vmax.f32 %v386, 0.0
    %v669 = vmax.f32 %v391, 0.0
    %v670 = vmax.f32 %v396, 0.0
    %v671 = vmax.f32 %v401, 0.0
    %v672 = vmax.f32 %v406, 0.0
    %v673 = vmax.f32 %v411, 0.0
    %v674 = vmax.f32 %v416, 0.0
    %v675 = vmax.f32 %v421, 0.0
    %v676 = vmax.f32 %v426, 0.0
    %v677 = vmax.f32 %v431, 0.0
    %v678 = vmax.f32 %v436, 0.0
    %v679 = vmax.f32 %v441, 0.0
    %v680 = vmax.f32 %v446, 0.0
    %v681 = vmax.f32 %v451, 0.0
    %v682 = vmax.f32 %v456, 0.0
    %v683 = vmax.f32 %v461, 0.0
    %v684 = vmax.f32 %v466, 0.0
    %v685 = vmax.f32 %v471, 0.0
    %v686 = vmax.f32 %v476, 0.0
    %v687 = vmax.f32 %v481, 0.0
    %v688 = vmax.f32 %v486, 0.0
    %v689 = vmax.f32 %v491, 0.0
    %v690 = vmax.f32 %v496, 0.0
    %v691 = vmax.f32 %v501, 0.0
    %v692 = vmax.f32 %v506, 0.0
    %v693 = vmax.f32 %v511, 0.0
    %v694 = vmax.f32 %v516, 0.0
    %v695 = vmax.f32 %v521, 0.0
    %v696 = vmax.f32 %v526, 0.0
    %v697 = vmax.f32 %v531, 0.0
    %v698 = vmax.f32 %v536, 0.0
    %v699 = vmax.f32 %v541, 0.0
    %v700 = vmax.f32 %v546, 0.0
    %v701 = vmax.f32 %v551, 0.0
    %v702 = vmax.f32 %v556, 0.0
    %v703 = vmax.f32 %v561, 0.0
    %v704 = vmax.f32 %v566, 0.0
    %v705 = vmax.f32 %v571, 0.0
    %v706 = vmax.f32 %v576, 0.0
    %v707 = vmax.f32 %v581, 0.0
    %v708 = vmax.f32 %v586, 0.0
    %v709 = vmax.f32 %v591, 0.0
    %v710 = vmax.f32 %v596, 0.0
    %v711 = vmax.f32 %v601, 0.0
    %v712 = vmax.f32 %v606, 0.0
    %v713 = vmax.f32 %v611, 0.0
    %v714 = vmax.f32 %v616, 0.0
    %v715 = vmax.f32 %v621, 0.0
    %v716 = vmax.f32 %v626, 0.0
    %v717 = vmax.f32 %v631, 0.0
    %v718 = vmax.f32 %v636, 0.0
    %v719 = vmax.f32 %v641, 0.0
    %v720 = vmax.f32 %v646, 0.0
    %v721 = vmax.f32 %v651, 0.0
    %v722 = vmax.f32 %v656, 0.0
    %v723 = vld [vmem:[%s2] sm:$0xff]
    %v724 = vld [vmem:[%s2 + $0x8] sm:$0xff]
    %v726 = vsel %vm81, %v659, 0
    %v729 = vsel %vm81, %v660, 0
    %v732 = vsel %vm81, %v661, 0
    %v735 = vsel %vm81, %v662, 0
    %v738 = vsel %vm81, %v663, 0
    %v741 = vsel %vm81, %v664, 0
    %v744 = vsel %vm81, %v665, 0
    %v747 = vsel %vm81, %v666, 0
    %v750 = vsel %vm81, %v667, 0
    %v753 = vsel %vm81, %v668, 0
    %v756 = vsel %vm81, %v669, 0
    %v759 = vsel %vm81, %v670, 0
    %v762 = vsel %vm81, %v671, 0
    %v765 = vsel %vm81, %v672, 0
    %v768 = vsel %vm81, %v673, 0
    %v771 = vsel %vm81, %v674, 0
    %v774 = vsel %vm81, %v675, 0
    %v777 = vsel %vm81, %v676, 0
    %v780 = vsel %vm81, %v677, 0
    %v783 = vsel %vm81, %v678, 0
    %v786 = vsel %vm81, %v679, 0
    %v789 = vsel %vm81, %v680, 0
    %v792 = vsel %vm81, %v681, 0
    %v795 = vsel %vm81, %v682, 0
    %v798 = vsel %vm81, %v683, 0
    %v801 = vsel %vm81, %v684, 0
    %v804 = vsel %vm81, %v685, 0
    %v807 = vsel %vm81, %v686, 0
    %v810 = vsel %vm81, %v687, 0
    %v813 = vsel %vm81, %v688, 0
    %v816 = vsel %vm81, %v689, 0
    %v819 = vsel %vm81, %v690, 0
    %v822 = vsel %vm81, %v691, 0
    %v825 = vsel %vm81, %v692, 0
    %v828 = vsel %vm81, %v693, 0
    %v831 = vsel %vm81, %v694, 0
    %v834 = vsel %vm81, %v695, 0
    %v837 = vsel %vm81, %v696, 0
    %v840 = vsel %vm81, %v697, 0
    %v843 = vsel %vm81, %v698, 0
    %v846 = vsel %vm81, %v699, 0
    %v849 = vsel %vm81, %v700, 0
    %v852 = vsel %vm81, %v701, 0
    %v855 = vsel %vm81, %v702, 0
    %v858 = vsel %vm81, %v703, 0
    %v861 = vsel %vm81, %v704, 0
    %v864 = vsel %vm81, %v705, 0
    %v867 = vsel %vm81, %v706, 0
    %v870 = vsel %vm81, %v707, 0
    %v873 = vsel %vm81, %v708, 0
    %v876 = vsel %vm81, %v709, 0
    %v879 = vsel %vm81, %v710, 0
    %v882 = vsel %vm81, %v711, 0
    %v885 = vsel %vm81, %v712, 0
    %v888 = vsel %vm81, %v713, 0
    %v891 = vsel %vm81, %v714, 0
    %v894 = vsel %vm81, %v715, 0
    %v897 = vsel %vm81, %v716, 0
    %v900 = vsel %vm81, %v717, 0
    %v903 = vsel %vm81, %v718, 0
    %v906 = vsel %vm81, %v719, 0
    %v909 = vsel %vm81, %v720, 0
    %v912 = vsel %vm81, %v721, 0
    %v915 = vsel %vm81, %v722, 0
    %917 = vmatprep.subr.mxu0 0.0
    %918 = vmatpush1.msra.mxu0 0.0
    %919 = vmatprep.subr.mxu0 0.0
    %920 = vmatpush1.msra.mxu0 0.0
    %921 = vmatprep.subr.mxu0 0.0
    %922 = vmatpush1.msra.mxu0 0.0
    %923 = vmatprep.subr.mxu0 0.0
    %924 = vmatpush1.msra.mxu0 0.0
    %925 = vmatprep.subr.mxu0 0.0
    %926 = vmatpush1.msra.mxu0 0.0
    %927 = vmatprep.subr.mxu0 0.0
    %928 = vmatpush1.msra.mxu0 0.0
    %929 = vmatprep.subr.mxu0 0.0
    %930 = vmatpush1.msra.mxu0 0.0
    %931 = vmatprep.subr.mxu0 0.0
    %932 = vmatpush1.msra.mxu0 0.0
    %933 = vmatprep.subr.mxu0 0.0
    %934 = vmatpush1.msra.mxu0 0.0
    %935 = vmatprep.subr.mxu0 0.0
    %936 = vmatpush1.msra.mxu0 0.0
    %937 = vmatprep.subr.mxu0 0.0
    %938 = vmatpush1.msra.mxu0 0.0
    %939 = vmatprep.subr.mxu0 0.0
    %940 = vmatpush1.msra.mxu0 0.0
    %941 = vmatprep.subr.mxu0 0.0
    %942 = vmatpush1.msra.mxu0 0.0
    %943 = vmatprep.subr.mxu0 0.0
    %944 = vmatpush1.msra.mxu0 0.0
    %945 = vmatprep.subr.mxu0 0.0
    %946 = vmatpush1.msra.mxu0 %v724
    %947 = vmatprep.subr.mxu0 0.0
    %948 = vmatpush1.msra.mxu0 %v723
    %949 = vmatprep.subr.mxu0 0.0
    %950 = vmatpush2.msra.mxu0 0.0
    %951 = vmatprep.subr.mxu0 0.0
    %952 = vmatpush2.msra.mxu0 0.0
    %953 = vmatprep.subr.mxu0 0.0
    %954 = vmatpush2.msra.mxu0 0.0
    %955 = vmatprep.subr.mxu0 0.0
    %956 = vmatpush2.msra.mxu0 0.0
    %957 = vmatprep.subr.mxu0 0.0
    %958 = vmatpush2.msra.mxu0 0.0
    %959 = vmatprep.subr.mxu0 0.0
    %960 = vmatpush2.msra.mxu0 0.0
    %961 = vmatprep.subr.mxu0 0.0
    %962 = vmatpush2.msra.mxu0 0.0
    %963 = vmatprep.subr.mxu0 0.0
    %964 = vmatpush2.msra.mxu0 0.0
    %965 = vmatprep.subr.mxu0 0.0
    %966 = vmatpush2.msra.mxu0 0.0
    %967 = vmatprep.subr.mxu0 0.0
    %968 = vmatpush2.msra.mxu0 0.0
    %969 = vmatprep.subr.mxu0 0.0
    %970 = vmatpush2.msra.mxu0 0.0
    %971 = vmatprep.subr.mxu0 0.0
    %972 = vmatpush2.msra.mxu0 0.0
    %973 = vmatprep.subr.mxu0 0.0
    %974 = vmatpush2.msra.mxu0 0.0
    %975 = vmatprep.subr.mxu0 0.0
    %976 = vmatpush2.msra.mxu0 0.0
    %977 = vmatprep.subr.mxu0 0.0
    %978 = vmatpush2.msra.mxu0 0.0
    %979 = vmatprep.subr.mxu0 0.0
    %980 = vmatpush2.msra.mxu0 0.0
    %981 = vmatprep.mubr.f32.mxu0 0.0
    %982 = vmatmul.mubr.f32.gmra.mxu0 %v726
    %v983 = vpop.f32.mrf.mxu0
    %v984 = vadd.f32 0.0, %v983
    %v985 = vpop.f32.mrf.mxu0
    %986 = vmatprep.mubr.f32.mxu0 0.0
    %987 = vmatmul.mubr.f32.gmra.mxu0 %v729
    %v988 = vpop.f32.mrf.mxu0
    %v989 = vadd.f32 0.0, %v988
    %v990 = vpop.f32.mrf.mxu0
    %991 = vmatprep.mubr.f32.mxu0 0.0
    %992 = vmatmul.mubr.f32.gmra.mxu0 %v732
    %v993 = vpop.f32.mrf.mxu0
    %v994 = vadd.f32 0.0, %v993
    %v995 = vpop.f32.mrf.mxu0
    %996 = vmatprep.mubr.f32.mxu0 0.0
    %997 = vmatmul.mubr.f32.gmra.mxu0 %v735
    %v998 = vpop.f32.mrf.mxu0
    %v999 = vadd.f32 0.0, %v998
    %v1000 = vpop.f32.mrf.mxu0
    %1001 = vmatprep.mubr.f32.mxu0 0.0
    %1002 = vmatmul.mubr.f32.gmra.mxu0 %v738
    %v1003 = vpop.f32.mrf.mxu0
    %v1004 = vadd.f32 0.0, %v1003
    %v1005 = vpop.f32.mrf.mxu0
    %1006 = vmatprep.mubr.f32.mxu0 0.0
    %1007 = vmatmul.mubr.f32.gmra.mxu0 %v741
    %v1008 = vpop.f32.mrf.mxu0
    %v1009 = vadd.f32 0.0, %v1008
    %v1010 = vpop.f32.mrf.mxu0
    %1011 = vmatprep.mubr.f32.mxu0 0.0
    %1012 = vmatmul.mubr.f32.gmra.mxu0 %v744
    %v1013 = vpop.f32.mrf.mxu0
    %v1014 = vadd.f32 0.0, %v1013
    %v1015 = vpop.f32.mrf.mxu0
    %1016 = vmatprep.mubr.f32.mxu0 0.0
    %1017 = vmatmul.mubr.f32.gmra.mxu0 %v747
    %v1018 = vpop.f32.mrf.mxu0
    %v1019 = vadd.f32 0.0, %v1018
    %v1020 = vpop.f32.mrf.mxu0
    %1021 = vmatprep.mubr.f32.mxu0 0.0
    %1022 = vmatmul.mubr.f32.gmra.mxu0 %v750
    %v1023 = vpop.f32.mrf.mxu0
    %v1024 = vadd.f32 0.0, %v1023
    %v1025 = vpop.f32.mrf.mxu0
    %1026 = vmatprep.mubr.f32.mxu0 0.0
    %1027 = vmatmul.mubr.f32.gmra.mxu0 %v753
    %v1028 = vpop.f32.mrf.mxu0
    %v1029 = vadd.f32 0.0, %v1028
    %v1030 = vpop.f32.mrf.mxu0
    %1031 = vmatprep.mubr.f32.mxu0 0.0
    %1032 = vmatmul.mubr.f32.gmra.mxu0 %v756
    %v1033 = vpop.f32.mrf.mxu0
    %v1034 = vadd.f32 0.0, %v1033
    %v1035 = vpop.f32.mrf.mxu0
    %1036 = vmatprep.mubr.f32.mxu0 0.0
    %1037 = vmatmul.mubr.f32.gmra.mxu0 %v759
    %v1038 = vpop.f32.mrf.mxu0
    %v1039 = vadd.f32 0.0, %v1038
    %v1040 = vpop.f32.mrf.mxu0
    %1041 = vmatprep.mubr.f32.mxu0 0.0
    %1042 = vmatmul.mubr.f32.gmra.mxu0 %v762
    %v1043 = vpop.f32.mrf.mxu0
    %v1044 = vadd.f32 0.0, %v1043
    %v1045 = vpop.f32.mrf.mxu0
    %1046 = vmatprep.mubr.f32.mxu0 0.0
    %1047 = vmatmul.mubr.f32.gmra.mxu0 %v765
    %v1048 = vpop.f32.mrf.mxu0
    %v1049 = vadd.f32 0.0, %v1048
    %v1050 = vpop.f32.mrf.mxu0
    %1051 = vmatprep.mubr.f32.mxu0 0.0
    %1052 = vmatmul.mubr.f32.gmra.mxu0 %v768
    %v1053 = vpop.f32.mrf.mxu0
    %v1054 = vadd.f32 0.0, %v1053
    %v1055 = vpop.f32.mrf.mxu0
    %1056 = vmatprep.mubr.f32.mxu0 0.0
    %1057 = vmatmul.mubr.f32.gmra.mxu0 %v771
    %v1058 = vpop.f32.mrf.mxu0
    %v1059 = vadd.f32 0.0, %v1058
    %v1060 = vpop.f32.mrf.mxu0
    %1061 = vmatprep.mubr.f32.mxu0 0.0
    %1062 = vmatmul.mubr.f32.gmra.mxu0 %v774
    %v1063 = vpop.f32.mrf.mxu0
    %v1064 = vadd.f32 0.0, %v1063
    %v1065 = vpop.f32.mrf.mxu0
    %1066 = vmatprep.mubr.f32.mxu0 0.0
    %1067 = vmatmul.mubr.f32.gmra.mxu0 %v777
    %v1068 = vpop.f32.mrf.mxu0
    %v1069 = vadd.f32 0.0, %v1068
    %v1070 = vpop.f32.mrf.mxu0
    %1071 = vmatprep.mubr.f32.mxu0 0.0
    %1072 = vmatmul.mubr.f32.gmra.mxu0 %v780
    %v1073 = vpop.f32.mrf.mxu0
    %v1074 = vadd.f32 0.0, %v1073
    %v1075 = vpop.f32.mrf.mxu0
    %1076 = vmatprep.mubr.f32.mxu0 0.0
    %1077 = vmatmul.mubr.f32.gmra.mxu0 %v783
    %v1078 = vpop.f32.mrf.mxu0
    %v1079 = vadd.f32 0.0, %v1078
    %v1080 = vpop.f32.mrf.mxu0
    %1081 = vmatprep.mubr.f32.mxu0 0.0
    %1082 = vmatmul.mubr.f32.gmra.mxu0 %v786
    %v1083 = vpop.f32.mrf.mxu0
    %v1084 = vadd.f32 0.0, %v1083
    %v1085 = vpop.f32.mrf.mxu0
    %1086 = vmatprep.mubr.f32.mxu0 0.0
    %1087 = vmatmul.mubr.f32.gmra.mxu0 %v789
    %v1088 = vpop.f32.mrf.mxu0
    %v1089 = vadd.f32 0.0, %v1088
    %v1090 = vpop.f32.mrf.mxu0
    %1091 = vmatprep.mubr.f32.mxu0 0.0
    %1092 = vmatmul.mubr.f32.gmra.mxu0 %v792
    %v1093 = vpop.f32.mrf.mxu0
    %v1094 = vadd.f32 0.0, %v1093
    %v1095 = vpop.f32.mrf.mxu0
    %1096 = vmatprep.mubr.f32.mxu0 0.0
    %1097 = vmatmul.mubr.f32.gmra.mxu0 %v795
    %v1098 = vpop.f32.mrf.mxu0
    %v1099 = vadd.f32 0.0, %v1098
    %v1100 = vpop.f32.mrf.mxu0
    %1101 = vmatprep.mubr.f32.mxu0 0.0
    %1102 = vmatmul.mubr.f32.gmra.mxu0 %v798
    %v1103 = vpop.f32.mrf.mxu0
    %v1104 = vadd.f32 0.0, %v1103
    %v1105 = vpop.f32.mrf.mxu0
    %1106 = vmatprep.mubr.f32.mxu0 0.0
    %1107 = vmatmul.mubr.f32.gmra.mxu0 %v801
    %v1108 = vpop.f32.mrf.mxu0
    %v1109 = vadd.f32 0.0, %v1108
    %v1110 = vpop.f32.mrf.mxu0
    %1111 = vmatprep.mubr.f32.mxu0 0.0
    %1112 = vmatmul.mubr.f32.gmra.mxu0 %v804
    %v1113 = vpop.f32.mrf.mxu0
    %v1114 = vadd.f32 0.0, %v1113
    %v1115 = vpop.f32.mrf.mxu0
    %1116 = vmatprep.mubr.f32.mxu0 0.0
    %1117 = vmatmul.mubr.f32.gmra.mxu0 %v807
    %v1118 = vpop.f32.mrf.mxu0
    %v1119 = vadd.f32 0.0, %v1118
    %v1120 = vpop.f32.mrf.mxu0
    %1121 = vmatprep.mubr.f32.mxu0 0.0
    %1122 = vmatmul.mubr.f32.gmra.mxu0 %v810
    %v1123 = vpop.f32.mrf.mxu0
    %v1124 = vadd.f32 0.0, %v1123
    %v1125 = vpop.f32.mrf.mxu0
    %1126 = vmatprep.mubr.f32.mxu0 0.0
    %1127 = vmatmul.mubr.f32.gmra.mxu0 %v813
    %v1128 = vpop.f32.mrf.mxu0
    %v1129 = vadd.f32 0.0, %v1128
    %v1130 = vpop.f32.mrf.mxu0
    %1131 = vmatprep.mubr.f32.mxu0 0.0
    %1132 = vmatmul.mubr.f32.gmra.mxu0 %v816
    %v1133 = vpop.f32.mrf.mxu0
    %v1134 = vadd.f32 0.0, %v1133
    %v1135 = vpop.f32.mrf.mxu0
    %1136 = vmatprep.mubr.f32.mxu0 0.0
    %1137 = vmatmul.mubr.f32.gmra.mxu0 %v819
    %v1138 = vpop.f32.mrf.mxu0
    %v1139 = vadd.f32 0.0, %v1138
    %v1140 = vpop.f32.mrf.mxu0
    %1141 = vmatprep.mubr.f32.mxu0 0.0
    %1142 = vmatmul.mubr.f32.gmra.mxu0 %v822
    %v1143 = vpop.f32.mrf.mxu0
    %v1144 = vadd.f32 0.0, %v1143
    %v1145 = vpop.f32.mrf.mxu0
    %1146 = vmatprep.mubr.f32.mxu0 0.0
    %1147 = vmatmul.mubr.f32.gmra.mxu0 %v825
    %v1148 = vpop.f32.mrf.mxu0
    %v1149 = vadd.f32 0.0, %v1148
    %v1150 = vpop.f32.mrf.mxu0
    %1151 = vmatprep.mubr.f32.mxu0 0.0
    %1152 = vmatmul.mubr.f32.gmra.mxu0 %v828
    %v1153 = vpop.f32.mrf.mxu0
    %v1154 = vadd.f32 0.0, %v1153
    %v1155 = vpop.f32.mrf.mxu0
    %1156 = vmatprep.mubr.f32.mxu0 0.0
    %1157 = vmatmul.mubr.f32.gmra.mxu0 %v831
    %v1158 = vpop.f32.mrf.mxu0
    %v1159 = vadd.f32 0.0, %v1158
    %v1160 = vpop.f32.mrf.mxu0
    %1161 = vmatprep.mubr.f32.mxu0 0.0
    %1162 = vmatmul.mubr.f32.gmra.mxu0 %v834
    %v1163 = vpop.f32.mrf.mxu0
    %v1164 = vadd.f32 0.0, %v1163
    %v1165 = vpop.f32.mrf.mxu0
    %1166 = vmatprep.mubr.f32.mxu0 0.0
    %1167 = vmatmul.mubr.f32.gmra.mxu0 %v837
    %v1168 = vpop.f32.mrf.mxu0
    %v1169 = vadd.f32 0.0, %v1168
    %v1170 = vpop.f32.mrf.mxu0
    %1171 = vmatprep.mubr.f32.mxu0 0.0
    %1172 = vmatmul.mubr.f32.gmra.mxu0 %v840
    %v1173 = vpop.f32.mrf.mxu0
    %v1174 = vadd.f32 0.0, %v1173
    %v1175 = vpop.f32.mrf.mxu0
    %1176 = vmatprep.mubr.f32.mxu0 0.0
    %1177 = vmatmul.mubr.f32.gmra.mxu0 %v843
    %v1178 = vpop.f32.mrf.mxu0
    %v1179 = vadd.f32 0.0, %v1178
    %v1180 = vpop.f32.mrf.mxu0
    %1181 = vmatprep.mubr.f32.mxu0 0.0
    %1182 = vmatmul.mubr.f32.gmra.mxu0 %v846
    %v1183 = vpop.f32.mrf.mxu0
    %v1184 = vadd.f32 0.0, %v1183
    %v1185 = vpop.f32.mrf.mxu0
    %1186 = vmatprep.mubr.f32.mxu0 0.0
    %1187 = vmatmul.mubr.f32.gmra.mxu0 %v849
    %v1188 = vpop.f32.mrf.mxu0
    %v1189 = vadd.f32 0.0, %v1188
    %v1190 = vpop.f32.mrf.mxu0
    %1191 = vmatprep.mubr.f32.mxu0 0.0
    %1192 = vmatmul.mubr.f32.gmra.mxu0 %v852
    %v1193 = vpop.f32.mrf.mxu0
    %v1194 = vadd.f32 0.0, %v1193
    %v1195 = vpop.f32.mrf.mxu0
    %1196 = vmatprep.mubr.f32.mxu0 0.0
    %1197 = vmatmul.mubr.f32.gmra.mxu0 %v855
    %v1198 = vpop.f32.mrf.mxu0
    %v1199 = vadd.f32 0.0, %v1198
    %v1200 = vpop.f32.mrf.mxu0
    %1201 = vmatprep.mubr.f32.mxu0 0.0
    %1202 = vmatmul.mubr.f32.gmra.mxu0 %v858
    %v1203 = vpop.f32.mrf.mxu0
    %v1204 = vadd.f32 0.0, %v1203
    %v1205 = vpop.f32.mrf.mxu0
    %1206 = vmatprep.mubr.f32.mxu0 0.0
    %1207 = vmatmul.mubr.f32.gmra.mxu0 %v861
    %v1208 = vpop.f32.mrf.mxu0
    %v1209 = vadd.f32 0.0, %v1208
    %v1210 = vpop.f32.mrf.mxu0
    %1211 = vmatprep.mubr.f32.mxu0 0.0
    %1212 = vmatmul.mubr.f32.gmra.mxu0 %v864
    %v1213 = vpop.f32.mrf.mxu0
    %v1214 = vadd.f32 0.0, %v1213
    %v1215 = vpop.f32.mrf.mxu0
    %1216 = vmatprep.mubr.f32.mxu0 0.0
    %1217 = vmatmul.mubr.f32.gmra.mxu0 %v867
    %v1218 = vpop.f32.mrf.mxu0
    %v1219 = vadd.f32 0.0, %v1218
    %v1220 = vpop.f32.mrf.mxu0
    %1221 = vmatprep.mubr.f32.mxu0 0.0
    %1222 = vmatmul.mubr.f32.gmra.mxu0 %v870
    %v1223 = vpop.f32.mrf.mxu0
    %v1224 = vadd.f32 0.0, %v1223
    %v1225 = vpop.f32.mrf.mxu0
    %1226 = vmatprep.mubr.f32.mxu0 0.0
    %1227 = vmatmul.mubr.f32.gmra.mxu0 %v873
    %v1228 = vpop.f32.mrf.mxu0
    %v1229 = vadd.f32 0.0, %v1228
    %v1230 = vpop.f32.mrf.mxu0
    %1231 = vmatprep.mubr.f32.mxu0 0.0
    %1232 = vmatmul.mubr.f32.gmra.mxu0 %v876
    %v1233 = vpop.f32.mrf.mxu0
    %v1234 = vadd.f32 0.0, %v1233
    %v1235 = vpop.f32.mrf.mxu0
    %1236 = vmatprep.mubr.f32.mxu0 0.0
    %1237 = vmatmul.mubr.f32.gmra.mxu0 %v879
    %v1238 = vpop.f32.mrf.mxu0
    %v1239 = vadd.f32 0.0, %v1238
    %v1240 = vpop.f32.mrf.mxu0
    %1241 = vmatprep.mubr.f32.mxu0 0.0
    %1242 = vmatmul.mubr.f32.gmra.mxu0 %v882
    %v1243 = vpop.f32.mrf.mxu0
    %v1244 = vadd.f32 0.0, %v1243
    %v1245 = vpop.f32.mrf.mxu0
    %1246 = vmatprep.mubr.f32.mxu0 0.0
    %1247 = vmatmul.mubr.f32.gmra.mxu0 %v885
    %v1248 = vpop.f32.mrf.mxu0
    %v1249 = vadd.f32 0.0, %v1248
    %v1250 = vpop.f32.mrf.mxu0
    %1251 = vmatprep.mubr.f32.mxu0 0.0
    %1252 = vmatmul.mubr.f32.gmra.mxu0 %v888
    %v1253 = vpop.f32.mrf.mxu0
    %v1254 = vadd.f32 0.0, %v1253
    %v1255 = vpop.f32.mrf.mxu0
    %1256 = vmatprep.mubr.f32.mxu0 0.0
    %1257 = vmatmul.mubr.f32.gmra.mxu0 %v891
    %v1258 = vpop.f32.mrf.mxu0
    %v1259 = vadd.f32 0.0, %v1258
    %v1260 = vpop.f32.mrf.mxu0
    %1261 = vmatprep.mubr.f32.mxu0 0.0
    %1262 = vmatmul.mubr.f32.gmra.mxu0 %v894
    %v1263 = vpop.f32.mrf.mxu0
    %v1264 = vadd.f32 0.0, %v1263
    %v1265 = vpop.f32.mrf.mxu0
    %1266 = vmatprep.mubr.f32.mxu0 0.0
    %1267 = vmatmul.mubr.f32.gmra.mxu0 %v897
    %v1268 = vpop.f32.mrf.mxu0
    %v1269 = vadd.f32 0.0, %v1268
    %v1270 = vpop.f32.mrf.mxu0
    %1271 = vmatprep.mubr.f32.mxu0 0.0
    %1272 = vmatmul.mubr.f32.gmra.mxu0 %v900
    %v1273 = vpop.f32.mrf.mxu0
    %v1274 = vadd.f32 0.0, %v1273
    %v1275 = vpop.f32.mrf.mxu0
    %1276 = vmatprep.mubr.f32.mxu0 0.0
    %1277 = vmatmul.mubr.f32.gmra.mxu0 %v903
    %v1278 = vpop.f32.mrf.mxu0
    %v1279 = vadd.f32 0.0, %v1278
    %v1280 = vpop.f32.mrf.mxu0
    %1281 = vmatprep.mubr.f32.mxu0 0.0
    %1282 = vmatmul.mubr.f32.gmra.mxu0 %v906
    %v1283 = vpop.f32.mrf.mxu0
    %v1284 = vadd.f32 0.0, %v1283
    %v1285 = vpop.f32.mrf.mxu0
    %1286 = vmatprep.mubr.f32.mxu0 0.0
    %1287 = vmatmul.mubr.f32.gmra.mxu0 %v909
    %v1288 = vpop.f32.mrf.mxu0
    %v1289 = vadd.f32 0.0, %v1288
    %v1290 = vpop.f32.mrf.mxu0
    %1291 = vmatprep.mubr.f32.mxu0 0.0
    %1292 = vmatmul.mubr.f32.gmra.mxu0 %v912
    %v1293 = vpop.f32.mrf.mxu0
    %v1294 = vadd.f32 0.0, %v1293
    %v1295 = vpop.f32.mrf.mxu0
    %1296 = vmatprep.mubr.f32.mxu0 0.0
    %1297 = vmatmul.mubr.f32.gmra.mxu0 %v915
    %v1298 = vpop.f32.mrf.mxu0
    %v1299 = vadd.f32 0.0, %v1298
    %v1300 = vpop.f32.mrf.mxu0
    %1301 = vdwg.mxu0
    %v1302 = vlaneseq
    %v1303 = vand.u32 %v1302, 127
    %vm1304 = vcmp.lt.s32.totalorder %v1303, 32
    %vm1305 = vcmp.eq.s32.totalorder %v1303, 32
    %v1306 = vsel %vm1304, %v984, 0.0
    %v1307 = vsel %vm1304, %v989, 0.0
    %v1308 = vsel %vm1304, %v994, 0.0
    %v1309 = vsel %vm1304, %v999, 0.0
    %v1310 = vsel %vm1304, %v1004, 0.0
    %v1311 = vsel %vm1304, %v1009, 0.0
    %v1312 = vsel %vm1304, %v1014, 0.0
    %v1313 = vsel %vm1304, %v1019, 0.0
    %v1314 = vsel %vm1304, %v1024, 0.0
    %v1315 = vsel %vm1304, %v1029, 0.0
    %v1316 = vsel %vm1304, %v1034, 0.0
    %v1317 = vsel %vm1304, %v1039, 0.0
    %v1318 = vsel %vm1304, %v1044, 0.0
    %v1319 = vsel %vm1304, %v1049, 0.0
    %v1320 = vsel %vm1304, %v1054, 0.0
    %v1321 = vsel %vm1304, %v1059, 0.0
    %v1322 = vsel %vm1304, %v1064, 0.0
    %v1323 = vsel %vm1304, %v1069, 0.0
    %v1324 = vsel %vm1304, %v1074, 0.0
    %v1325 = vsel %vm1304, %v1079, 0.0
    %v1326 = vsel %vm1304, %v1084, 0.0
    %v1327 = vsel %vm1304, %v1089, 0.0
    %v1328 = vsel %vm1304, %v1094, 0.0
    %v1329 = vsel %vm1304, %v1099, 0.0
    %v1330 = vsel %vm1304, %v1104, 0.0
    %v1331 = vsel %vm1304, %v1109, 0.0
    %v1332 = vsel %vm1304, %v1114, 0.0
    %v1333 = vsel %vm1304, %v1119, 0.0
    %v1334 = vsel %vm1304, %v1124, 0.0
    %v1335 = vsel %vm1304, %v1129, 0.0
    %v1336 = vsel %vm1304, %v1134, 0.0
    %v1337 = vsel %vm1304, %v1139, 0.0
    %v1338 = vsel %vm1304, %v1144, 0.0
    %v1339 = vsel %vm1304, %v1149, 0.0
    %v1340 = vsel %vm1304, %v1154, 0.0
    %v1341 = vsel %vm1304, %v1159, 0.0
    %v1342 = vsel %vm1304, %v1164, 0.0
    %v1343 = vsel %vm1304, %v1169, 0.0
    %v1344 = vsel %vm1304, %v1174, 0.0
    %v1345 = vsel %vm1304, %v1179, 0.0
    %v1346 = vsel %vm1304, %v1184, 0.0
    %v1347 = vsel %vm1304, %v1189, 0.0
    %v1348 = vsel %vm1304, %v1194, 0.0
    %v1349 = vsel %vm1304, %v1199, 0.0
    %v1350 = vsel %vm1304, %v1204, 0.0
    %v1351 = vsel %vm1304, %v1209, 0.0
    %v1352 = vsel %vm1304, %v1214, 0.0
    %v1353 = vsel %vm1304, %v1219, 0.0
    %v1354 = vsel %vm1304, %v1224, 0.0
    %v1355 = vsel %vm1304, %v1229, 0.0
    %v1356 = vsel %vm1304, %v1234, 0.0
    %v1357 = vsel %vm1304, %v1239, 0.0
    %v1358 = vsel %vm1304, %v1244, 0.0
    %v1359 = vsel %vm1304, %v1249, 0.0
    %v1360 = vsel %vm1304, %v1254, 0.0
    %v1361 = vsel %vm1304, %v1259, 0.0
    %v1362 = vsel %vm1304, %v1264, 0.0
    %v1363 = vsel %vm1304, %v1269, 0.0
    %v1364 = vsel %vm1304, %v1274, 0.0
    %v1365 = vsel %vm1304, %v1279, 0.0
    %v1366 = vsel %vm1304, %v1284, 0.0
    %v1367 = vsel %vm1304, %v1289, 0.0
    %v1368 = vsel %vm1304, %v1294, 0.0
    %v1369 = vsel %vm1304, %v1299, 0.0
    %v1370 = vmul.f32 %v1306, %v1306
    %v1371 = vmul.f32 %v1307, %v1307
    %v1372 = vmul.f32 %v1308, %v1308
    %v1373 = vmul.f32 %v1309, %v1309
    %v1374 = vmul.f32 %v1310, %v1310
    %v1375 = vmul.f32 %v1311, %v1311
    %v1376 = vmul.f32 %v1312, %v1312
    %v1377 = vmul.f32 %v1313, %v1313
    %v1378 = vmul.f32 %v1314, %v1314
    %v1379 = vmul.f32 %v1315, %v1315
    %v1380 = vmul.f32 %v1316, %v1316
    %v1381 = vmul.f32 %v1317, %v1317
    %v1382 = vmul.f32 %v1318, %v1318
    %v1383 = vmul.f32 %v1319, %v1319
    %v1384 = vmul.f32 %v1320, %v1320
    %v1385 = vmul.f32 %v1321, %v1321
    %v1386 = vmul.f32 %v1322, %v1322
    %v1387 = vmul.f32 %v1323, %v1323
    %v1388 = vmul.f32 %v1324, %v1324
    %v1389 = vmul.f32 %v1325, %v1325
    %v1390 = vmul.f32 %v1326, %v1326
    %v1391 = vmul.f32 %v1327, %v1327
    %v1392 = vmul.f32 %v1328, %v1328
    %v1393 = vmul.f32 %v1329, %v1329
    %v1394 = vmul.f32 %v1330, %v1330
    %v1395 = vmul.f32 %v1331, %v1331
    %v1396 = vmul.f32 %v1332, %v1332
    %v1397 = vmul.f32 %v1333, %v1333
    %v1398 = vmul.f32 %v1334, %v1334
    %v1399 = vmul.f32 %v1335, %v1335
    %v1400 = vmul.f32 %v1336, %v1336
    %v1401 = vmul.f32 %v1337, %v1337
    %v1402 = vmul.f32 %v1338, %v1338
    %v1403 = vmul.f32 %v1339, %v1339
    %v1404 = vmul.f32 %v1340, %v1340
    %v1405 = vmul.f32 %v1341, %v1341
    %v1406 = vmul.f32 %v1342, %v1342
    %v1407 = vmul.f32 %v1343, %v1343
    %v1408 = vmul.f32 %v1344, %v1344
    %v1409 = vmul.f32 %v1345, %v1345
    %v1410 = vmul.f32 %v1346, %v1346
    %v1411 = vmul.f32 %v1347, %v1347
    %v1412 = vmul.f32 %v1348, %v1348
    %v1413 = vmul.f32 %v1349, %v1349
    %v1414 = vmul.f32 %v1350, %v1350
    %v1415 = vmul.f32 %v1351, %v1351
    %v1416 = vmul.f32 %v1352, %v1352
    %v1417 = vmul.f32 %v1353, %v1353
    %v1418 = vmul.f32 %v1354, %v1354
    %v1419 = vmul.f32 %v1355, %v1355
    %v1420 = vmul.f32 %v1356, %v1356
    %v1421 = vmul.f32 %v1357, %v1357
    %v1422 = vmul.f32 %v1358, %v1358
    %v1423 = vmul.f32 %v1359, %v1359
    %v1424 = vmul.f32 %v1360, %v1360
    %v1425 = vmul.f32 %v1361, %v1361
    %v1426 = vmul.f32 %v1362, %v1362
    %v1427 = vmul.f32 %v1363, %v1363
    %v1428 = vmul.f32 %v1364, %v1364
    %v1429 = vmul.f32 %v1365, %v1365
    %v1430 = vmul.f32 %v1366, %v1366
    %v1431 = vmul.f32 %v1367, %v1367
    %v1432 = vmul.f32 %v1368, %v1368
    %v1433 = vmul.f32 %v1369, %v1369
    %1434 = vadd.xlane.f32.xlu0 %v1370
    %v1435 = vpop.xlane.xlu0 %1434
    %1436 = vadd.xlane.f32.xlu0 %v1371
    %v1437 = vpop.xlane.xlu0 %1436
    %1438 = vadd.xlane.f32.xlu0 %v1372
    %v1439 = vpop.xlane.xlu0 %1438
    %1440 = vadd.xlane.f32.xlu0 %v1373
    %v1441 = vpop.xlane.xlu0 %1440
    %1442 = vadd.xlane.f32.xlu0 %v1374
    %v1443 = vpop.xlane.xlu0 %1442
    %1444 = vadd.xlane.f32.xlu0 %v1375
    %v1445 = vpop.xlane.xlu0 %1444
    %1446 = vadd.xlane.f32.xlu0 %v1376
    %v1447 = vpop.xlane.xlu0 %1446
    %1448 = vadd.xlane.f32.xlu0 %v1377
    %v1449 = vpop.xlane.xlu0 %1448
    %1450 = vadd.xlane.f32.xlu0 %v1378
    %v1451 = vpop.xlane.xlu0 %1450
    %1452 = vadd.xlane.f32.xlu0 %v1379
    %v1453 = vpop.xlane.xlu0 %1452
    %1454 = vadd.xlane.f32.xlu0 %v1380
    %v1455 = vpop.xlane.xlu0 %1454
    %1456 = vadd.xlane.f32.xlu0 %v1381
    %v1457 = vpop.xlane.xlu0 %1456
    %1458 = vadd.xlane.f32.xlu0 %v1382
    %v1459 = vpop.xlane.xlu0 %1458
    %1460 = vadd.xlane.f32.xlu0 %v1383
    %v1461 = vpop.xlane.xlu0 %1460
    %1462 = vadd.xlane.f32.xlu0 %v1384
    %v1463 = vpop.xlane.xlu0 %1462
    %1464 = vadd.xlane.f32.xlu0 %v1385
    %v1465 = vpop.xlane.xlu0 %1464
    %1466 = vadd.xlane.f32.xlu0 %v1386
    %v1467 = vpop.xlane.xlu0 %1466
    %1468 = vadd.xlane.f32.xlu0 %v1387
    %v1469 = vpop.xlane.xlu0 %1468
    %1470 = vadd.xlane.f32.xlu0 %v1388
    %v1471 = vpop.xlane.xlu0 %1470
    %1472 = vadd.xlane.f32.xlu0 %v1389
    %v1473 = vpop.xlane.xlu0 %1472
    %1474 = vadd.xlane.f32.xlu0 %v1390
    %v1475 = vpop.xlane.xlu0 %1474
    %1476 = vadd.xlane.f32.xlu0 %v1391
    %v1477 = vpop.xlane.xlu0 %1476
    %1478 = vadd.xlane.f32.xlu0 %v1392
    %v1479 = vpop.xlane.xlu0 %1478
    %1480 = vadd.xlane.f32.xlu0 %v1393
    %v1481 = vpop.xlane.xlu0 %1480
    %1482 = vadd.xlane.f32.xlu0 %v1394
    %v1483 = vpop.xlane.xlu0 %1482
    %1484 = vadd.xlane.f32.xlu0 %v1395
    %v1485 = vpop.xlane.xlu0 %1484
    %1486 = vadd.xlane.f32.xlu0 %v1396
    %v1487 = vpop.xlane.xlu0 %1486
    %1488 = vadd.xlane.f32.xlu0 %v1397
    %v1489 = vpop.xlane.xlu0 %1488
    %1490 = vadd.xlane.f32.xlu0 %v1398
    %v1491 = vpop.xlane.xlu0 %1490
    %1492 = vadd.xlane.f32.xlu0 %v1399
    %v1493 = vpop.xlane.xlu0 %1492
    %1494 = vadd.xlane.f32.xlu0 %v1400
    %v1495 = vpop.xlane.xlu0 %1494
    %1496 = vadd.xlane.f32.xlu0 %v1401
    %v1497 = vpop.xlane.xlu0 %1496
    %1498 = vadd.xlane.f32.xlu0 %v1402
    %v1499 = vpop.xlane.xlu0 %1498
    %1500 = vadd.xlane.f32.xlu0 %v1403
    %v1501 = vpop.xlane.xlu0 %1500
    %1502 = vadd.xlane.f32.xlu0 %v1404
    %v1503 = vpop.xlane.xlu0 %1502
    %1504 = vadd.xlane.f32.xlu0 %v1405
    %v1505 = vpop.xlane.xlu0 %1504
    %1506 = vadd.xlane.f32.xlu0 %v1406
    %v1507 = vpop.xlane.xlu0 %1506
    %1508 = vadd.xlane.f32.xlu0 %v1407
    %v1509 = vpop.xlane.xlu0 %1508
    %1510 = vadd.xlane.f32.xlu0 %v1408
    %v1511 = vpop.xlane.xlu0 %1510
    %1512 = vadd.xlane.f32.xlu0 %v1409
    %v1513 = vpop.xlane.xlu0 %1512
    %1514 = vadd.xlane.f32.xlu0 %v1410
    %v1515 = vpop.xlane.xlu0 %1514
    %1516 = vadd.xlane.f32.xlu0 %v1411
    %v1517 = vpop.xlane.xlu0 %1516
    %1518 = vadd.xlane.f32.xlu0 %v1412
    %v1519 = vpop.xlane.xlu0 %1518
    %1520 = vadd.xlane.f32.xlu0 %v1413
    %v1521 = vpop.xlane.xlu0 %1520
    %1522 = vadd.xlane.f32.xlu0 %v1414
    %v1523 = vpop.xlane.xlu0 %1522
    %1524 = vadd.xlane.f32.xlu0 %v1415
    %v1525 = vpop.xlane.xlu0 %1524
    %1526 = vadd.xlane.f32.xlu0 %v1416
    %v1527 = vpop.xlane.xlu0 %1526
    %1528 = vadd.xlane.f32.xlu0 %v1417
    %v1529 = vpop.xlane.xlu0 %1528
    %1530 = vadd.xlane.f32.xlu0 %v1418
    %v1531 = vpop.xlane.xlu0 %1530
    %1532 = vadd.xlane.f32.xlu0 %v1419
    %v1533 = vpop.xlane.xlu0 %1532
    %1534 = vadd.xlane.f32.xlu0 %v1420
    %v1535 = vpop.xlane.xlu0 %1534
    %1536 = vadd.xlane.f32.xlu0 %v1421
    %v1537 = vpop.xlane.xlu0 %1536
    %1538 = vadd.xlane.f32.xlu0 %v1422
    %v1539 = vpop.xlane.xlu0 %1538
    %1540 = vadd.xlane.f32.xlu0 %v1423
    %v1541 = vpop.xlane.xlu0 %1540
    %1542 = vadd.xlane.f32.xlu0 %v1424
    %v1543 = vpop.xlane.xlu0 %1542
    %1544 = vadd.xlane.f32.xlu0 %v1425
    %v1545 = vpop.xlane.xlu0 %1544
    %1546 = vadd.xlane.f32.xlu0 %v1426
    %v1547 = vpop.xlane.xlu0 %1546
    %1548 = vadd.xlane.f32.xlu0 %v1427
    %v1549 = vpop.xlane.xlu0 %1548
    %1550 = vadd.xlane.f32.xlu0 %v1428
    %v1551 = vpop.xlane.xlu0 %1550
    %1552 = vadd.xlane.f32.xlu0 %v1429
    %v1553 = vpop.xlane.xlu0 %1552
    %1554 = vadd.xlane.f32.xlu0 %v1430
    %v1555 = vpop.xlane.xlu0 %1554
    %1556 = vadd.xlane.f32.xlu0 %v1431
    %v1557 = vpop.xlane.xlu0 %1556
    %1558 = vadd.xlane.f32.xlu0 %v1432
    %v1559 = vpop.xlane.xlu0 %1558
    %1560 = vadd.xlane.f32.xlu0 %v1433
    %v1561 = vpop.xlane.xlu0 %1560
    %v1562 = vadd.f32 %v1435, 1e-12
    %v1563 = vadd.f32 %v1437, 1e-12
    %v1564 = vadd.f32 %v1439, 1e-12
    %v1565 = vadd.f32 %v1441, 1e-12
    %v1566 = vadd.f32 %v1443, 1e-12
    %v1567 = vadd.f32 %v1445, 1e-12
    %v1568 = vadd.f32 %v1447, 1e-12
    %v1569 = vadd.f32 %v1449, 1e-12
    %v1570 = vadd.f32 %v1451, 1e-12
    %v1571 = vadd.f32 %v1453, 1e-12
    %v1572 = vadd.f32 %v1455, 1e-12
    %v1573 = vadd.f32 %v1457, 1e-12
    %v1574 = vadd.f32 %v1459, 1e-12
    %v1575 = vadd.f32 %v1461, 1e-12
    %v1576 = vadd.f32 %v1463, 1e-12
    %v1577 = vadd.f32 %v1465, 1e-12
    %v1578 = vadd.f32 %v1467, 1e-12
    %v1579 = vadd.f32 %v1469, 1e-12
    %v1580 = vadd.f32 %v1471, 1e-12
    %v1581 = vadd.f32 %v1473, 1e-12
    %v1582 = vadd.f32 %v1475, 1e-12
    %v1583 = vadd.f32 %v1477, 1e-12
    %v1584 = vadd.f32 %v1479, 1e-12
    %v1585 = vadd.f32 %v1481, 1e-12
    %v1586 = vadd.f32 %v1483, 1e-12
    %v1587 = vadd.f32 %v1485, 1e-12
    %v1588 = vadd.f32 %v1487, 1e-12
    %v1589 = vadd.f32 %v1489, 1e-12
    %v1590 = vadd.f32 %v1491, 1e-12
    %v1591 = vadd.f32 %v1493, 1e-12
    %v1592 = vadd.f32 %v1495, 1e-12
    %v1593 = vadd.f32 %v1497, 1e-12
    %v1594 = vadd.f32 %v1499, 1e-12
    %v1595 = vadd.f32 %v1501, 1e-12
    %v1596 = vadd.f32 %v1503, 1e-12
    %v1597 = vadd.f32 %v1505, 1e-12
    %v1598 = vadd.f32 %v1507, 1e-12
    %v1599 = vadd.f32 %v1509, 1e-12
    %v1600 = vadd.f32 %v1511, 1e-12
    %v1601 = vadd.f32 %v1513, 1e-12
    %v1602 = vadd.f32 %v1515, 1e-12
    %v1603 = vadd.f32 %v1517, 1e-12
    %v1604 = vadd.f32 %v1519, 1e-12
    %v1605 = vadd.f32 %v1521, 1e-12
    %v1606 = vadd.f32 %v1523, 1e-12
    %v1607 = vadd.f32 %v1525, 1e-12
    %v1608 = vadd.f32 %v1527, 1e-12
    %v1609 = vadd.f32 %v1529, 1e-12
    %v1610 = vadd.f32 %v1531, 1e-12
    %v1611 = vadd.f32 %v1533, 1e-12
    %v1612 = vadd.f32 %v1535, 1e-12
    %v1613 = vadd.f32 %v1537, 1e-12
    %v1614 = vadd.f32 %v1539, 1e-12
    %v1615 = vadd.f32 %v1541, 1e-12
    %v1616 = vadd.f32 %v1543, 1e-12
    %v1617 = vadd.f32 %v1545, 1e-12
    %v1618 = vadd.f32 %v1547, 1e-12
    %v1619 = vadd.f32 %v1549, 1e-12
    %v1620 = vadd.f32 %v1551, 1e-12
    %v1621 = vadd.f32 %v1553, 1e-12
    %v1622 = vadd.f32 %v1555, 1e-12
    %v1623 = vadd.f32 %v1557, 1e-12
    %v1624 = vadd.f32 %v1559, 1e-12
    %v1625 = vadd.f32 %v1561, 1e-12
    %v1626 = vrsqrt.pop %v1562
    %v1627 = vrsqrt.pop %v1563
    %v1628 = vrsqrt.pop %v1564
    %v1629 = vrsqrt.pop %v1565
    %v1630 = vrsqrt.pop %v1566
    %v1631 = vrsqrt.pop %v1567
    %v1632 = vrsqrt.pop %v1568
    %v1633 = vrsqrt.pop %v1569
    %v1634 = vrsqrt.pop %v1570
    %v1635 = vrsqrt.pop %v1571
    %v1636 = vrsqrt.pop %v1572
    %v1637 = vrsqrt.pop %v1573
    %v1638 = vrsqrt.pop %v1574
    %v1639 = vrsqrt.pop %v1575
    %v1640 = vrsqrt.pop %v1576
    %v1641 = vrsqrt.pop %v1577
    %v1642 = vrsqrt.pop %v1578
    %v1643 = vrsqrt.pop %v1579
    %v1644 = vrsqrt.pop %v1580
    %v1645 = vrsqrt.pop %v1581
    %v1646 = vrsqrt.pop %v1582
    %v1647 = vrsqrt.pop %v1583
    %v1648 = vrsqrt.pop %v1584
    %v1649 = vrsqrt.pop %v1585
    %v1650 = vrsqrt.pop %v1586
    %v1651 = vrsqrt.pop %v1587
    %v1652 = vrsqrt.pop %v1588
    %v1653 = vrsqrt.pop %v1589
    %v1654 = vrsqrt.pop %v1590
    %v1655 = vrsqrt.pop %v1591
    %v1656 = vrsqrt.pop %v1592
    %v1657 = vrsqrt.pop %v1593
    %v1658 = vrsqrt.pop %v1594
    %v1659 = vrsqrt.pop %v1595
    %v1660 = vrsqrt.pop %v1596
    %v1661 = vrsqrt.pop %v1597
    %v1662 = vrsqrt.pop %v1598
    %v1663 = vrsqrt.pop %v1599
    %v1664 = vrsqrt.pop %v1600
    %v1665 = vrsqrt.pop %v1601
    %v1666 = vrsqrt.pop %v1602
    %v1667 = vrsqrt.pop %v1603
    %v1668 = vrsqrt.pop %v1604
    %v1669 = vrsqrt.pop %v1605
    %v1670 = vrsqrt.pop %v1606
    %v1671 = vrsqrt.pop %v1607
    %v1672 = vrsqrt.pop %v1608
    %v1673 = vrsqrt.pop %v1609
    %v1674 = vrsqrt.pop %v1610
    %v1675 = vrsqrt.pop %v1611
    %v1676 = vrsqrt.pop %v1612
    %v1677 = vrsqrt.pop %v1613
    %v1678 = vrsqrt.pop %v1614
    %v1679 = vrsqrt.pop %v1615
    %v1680 = vrsqrt.pop %v1616
    %v1681 = vrsqrt.pop %v1617
    %v1682 = vrsqrt.pop %v1618
    %v1683 = vrsqrt.pop %v1619
    %v1684 = vrsqrt.pop %v1620
    %v1685 = vrsqrt.pop %v1621
    %v1686 = vrsqrt.pop %v1622
    %v1687 = vrsqrt.pop %v1623
    %v1688 = vrsqrt.pop %v1624
    %v1689 = vrsqrt.pop %v1625
    %v1690 = vxor.u32 %v984, 2147483648
    %v1691 = vxor.u32 %v989, 2147483648
    %v1692 = vxor.u32 %v994, 2147483648
    %v1693 = vxor.u32 %v999, 2147483648
    %v1694 = vxor.u32 %v1004, 2147483648
    %v1695 = vxor.u32 %v1009, 2147483648
    %v1696 = vxor.u32 %v1014, 2147483648
    %v1697 = vxor.u32 %v1019, 2147483648
    %v1698 = vxor.u32 %v1024, 2147483648
    %v1699 = vxor.u32 %v1029, 2147483648
    %v1700 = vxor.u32 %v1034, 2147483648
    %v1701 = vxor.u32 %v1039, 2147483648
    %v1702 = vxor.u32 %v1044, 2147483648
    %v1703 = vxor.u32 %v1049, 2147483648
    %v1704 = vxor.u32 %v1054, 2147483648
    %v1705 = vxor.u32 %v1059, 2147483648
    %v1706 = vxor.u32 %v1064, 2147483648
    %v1707 = vxor.u32 %v1069, 2147483648
    %v1708 = vxor.u32 %v1074, 2147483648
    %v1709 = vxor.u32 %v1079, 2147483648
    %v1710 = vxor.u32 %v1084, 2147483648
    %v1711 = vxor.u32 %v1089, 2147483648
    %v1712 = vxor.u32 %v1094, 2147483648
    %v1713 = vxor.u32 %v1099, 2147483648
    %v1714 = vxor.u32 %v1104, 2147483648
    %v1715 = vxor.u32 %v1109, 2147483648
    %v1716 = vxor.u32 %v1114, 2147483648
    %v1717 = vxor.u32 %v1119, 2147483648
    %v1718 = vxor.u32 %v1124, 2147483648
    %v1719 = vxor.u32 %v1129, 2147483648
    %v1720 = vxor.u32 %v1134, 2147483648
    %v1721 = vxor.u32 %v1139, 2147483648
    %v1722 = vxor.u32 %v1144, 2147483648
    %v1723 = vxor.u32 %v1149, 2147483648
    %v1724 = vxor.u32 %v1154, 2147483648
    %v1725 = vxor.u32 %v1159, 2147483648
    %v1726 = vxor.u32 %v1164, 2147483648
    %v1727 = vxor.u32 %v1169, 2147483648
    %v1728 = vxor.u32 %v1174, 2147483648
    %v1729 = vxor.u32 %v1179, 2147483648
    %v1730 = vxor.u32 %v1184, 2147483648
    %v1731 = vxor.u32 %v1189, 2147483648
    %v1732 = vxor.u32 %v1194, 2147483648
    %v1733 = vxor.u32 %v1199, 2147483648
    %v1734 = vxor.u32 %v1204, 2147483648
    %v1735 = vxor.u32 %v1209, 2147483648
    %v1736 = vxor.u32 %v1214, 2147483648
    %v1737 = vxor.u32 %v1219, 2147483648
    %v1738 = vxor.u32 %v1224, 2147483648
    %v1739 = vxor.u32 %v1229, 2147483648
    %v1740 = vxor.u32 %v1234, 2147483648
    %v1741 = vxor.u32 %v1239, 2147483648
    %v1742 = vxor.u32 %v1244, 2147483648
    %v1743 = vxor.u32 %v1249, 2147483648
    %v1744 = vxor.u32 %v1254, 2147483648
    %v1745 = vxor.u32 %v1259, 2147483648
    %v1746 = vxor.u32 %v1264, 2147483648
    %v1747 = vxor.u32 %v1269, 2147483648
    %v1748 = vxor.u32 %v1274, 2147483648
    %v1749 = vxor.u32 %v1279, 2147483648
    %v1750 = vxor.u32 %v1284, 2147483648
    %v1751 = vxor.u32 %v1289, 2147483648
    %v1752 = vxor.u32 %v1294, 2147483648
    %v1753 = vxor.u32 %v1299, 2147483648
    %v1754 = vmul.f32 %v1690, 1.442695
    %v1755 = vpow.pop %v1754
    %v1756 = vmul.f32 %v1691, 1.442695
    %v1757 = vpow.pop %v1756
    %v1758 = vmul.f32 %v1692, 1.442695
    %v1759 = vpow.pop %v1758
    %v1760 = vmul.f32 %v1693, 1.442695
    %v1761 = vpow.pop %v1760
    %v1762 = vmul.f32 %v1694, 1.442695
    %v1763 = vpow.pop %v1762
    %v1764 = vmul.f32 %v1695, 1.442695
    %v1765 = vpow.pop %v1764
    %v1766 = vmul.f32 %v1696, 1.442695
    %v1767 = vpow.pop %v1766
    %v1768 = vmul.f32 %v1697, 1.442695
    %v1769 = vpow.pop %v1768
    %v1770 = vmul.f32 %v1698, 1.442695
    %v1771 = vpow.pop %v1770
    %v1772 = vmul.f32 %v1699, 1.442695
    %v1773 = vpow.pop %v1772
    %v1774 = vmul.f32 %v1700, 1.442695
    %v1775 = vpow.pop %v1774
    %v1776 = vmul.f32 %v1701, 1.442695
    %v1777 = vpow.pop %v1776
    %v1778 = vmul.f32 %v1702, 1.442695
    %v1779 = vpow.pop %v1778
    %v1780 = vmul.f32 %v1703, 1.442695
    %v1781 = vpow.pop %v1780
    %v1782 = vmul.f32 %v1704, 1.442695
    %v1783 = vpow.pop %v1782
    %v1784 = vmul.f32 %v1705, 1.442695
    %v1785 = vpow.pop %v1784
    %v1786 = vmul.f32 %v1706, 1.442695
    %v1787 = vpow.pop %v1786
    %v1788 = vmul.f32 %v1707, 1.442695
    %v1789 = vpow.pop %v1788
    %v1790 = vmul.f32 %v1708, 1.442695
    %v1791 = vpow.pop %v1790
    %v1792 = vmul.f32 %v1709, 1.442695
    %v1793 = vpow.pop %v1792
    %v1794 = vmul.f32 %v1710, 1.442695
    %v1795 = vpow.pop %v1794
    %v1796 = vmul.f32 %v1711, 1.442695
    %v1797 = vpow.pop %v1796
    %v1798 = vmul.f32 %v1712, 1.442695
    %v1799 = vpow.pop %v1798
    %v1800 = vmul.f32 %v1713, 1.442695
    %v1801 = vpow.pop %v1800
    %v1802 = vmul.f32 %v1714, 1.442695
    %v1803 = vpow.pop %v1802
    %v1804 = vmul.f32 %v1715, 1.442695
    %v1805 = vpow.pop %v1804
    %v1806 = vmul.f32 %v1716, 1.442695
    %v1807 = vpow.pop %v1806
    %v1808 = vmul.f32 %v1717, 1.442695
    %v1809 = vpow.pop %v1808
    %v1810 = vmul.f32 %v1718, 1.442695
    %v1811 = vpow.pop %v1810
    %v1812 = vmul.f32 %v1719, 1.442695
    %v1813 = vpow.pop %v1812
    %v1814 = vmul.f32 %v1720, 1.442695
    %v1815 = vpow.pop %v1814
    %v1816 = vmul.f32 %v1721, 1.442695
    %v1817 = vpow.pop %v1816
    %v1818 = vmul.f32 %v1722, 1.442695
    %v1819 = vpow.pop %v1818
    %v1820 = vmul.f32 %v1723, 1.442695
    %v1821 = vpow.pop %v1820
    %v1822 = vmul.f32 %v1724, 1.442695
    %v1823 = vpow.pop %v1822
    %v1824 = vmul.f32 %v1725, 1.442695
    %v1825 = vpow.pop %v1824
    %v1826 = vmul.f32 %v1726, 1.442695
    %v1827 = vpow.pop %v1826
    %v1828 = vmul.f32 %v1727, 1.442695
    %v1829 = vpow.pop %v1828
    %v1830 = vmul.f32 %v1728, 1.442695
    %v1831 = vpow.pop %v1830
    %v1832 = vmul.f32 %v1729, 1.442695
    %v1833 = vpow.pop %v1832
    %v1834 = vmul.f32 %v1730, 1.442695
    %v1835 = vpow.pop %v1834
    %v1836 = vmul.f32 %v1731, 1.442695
    %v1837 = vpow.pop %v1836
    %v1838 = vmul.f32 %v1732, 1.442695
    %v1839 = vpow.pop %v1838
    %v1840 = vmul.f32 %v1733, 1.442695
    %v1841 = vpow.pop %v1840
    %v1842 = vmul.f32 %v1734, 1.442695
    %v1843 = vpow.pop %v1842
    %v1844 = vmul.f32 %v1735, 1.442695
    %v1845 = vpow.pop %v1844
    %v1846 = vmul.f32 %v1736, 1.442695
    %v1847 = vpow.pop %v1846
    %v1848 = vmul.f32 %v1737, 1.442695
    %v1849 = vpow.pop %v1848
    %v1850 = vmul.f32 %v1738, 1.442695
    %v1851 = vpow.pop %v1850
    %v1852 = vmul.f32 %v1739, 1.442695
    %v1853 = vpow.pop %v1852
    %v1854 = vmul.f32 %v1740, 1.442695
    %v1855 = vpow.pop %v1854
    %v1856 = vmul.f32 %v1741, 1.442695
    %v1857 = vpow.pop %v1856
    %v1858 = vmul.f32 %v1742, 1.442695
    %v1859 = vpow.pop %v1858
    %v1860 = vmul.f32 %v1743, 1.442695
    %v1861 = vpow.pop %v1860
    %v1862 = vmul.f32 %v1744, 1.442695
    %v1863 = vpow.pop %v1862
    %v1864 = vmul.f32 %v1745, 1.442695
    %v1865 = vpow.pop %v1864
    %v1866 = vmul.f32 %v1746, 1.442695
    %v1867 = vpow.pop %v1866
    %v1868 = vmul.f32 %v1747, 1.442695
    %v1869 = vpow.pop %v1868
    %v1870 = vmul.f32 %v1748, 1.442695
    %v1871 = vpow.pop %v1870
    %v1872 = vmul.f32 %v1749, 1.442695
    %v1873 = vpow.pop %v1872
    %v1874 = vmul.f32 %v1750, 1.442695
    %v1875 = vpow.pop %v1874
    %v1876 = vmul.f32 %v1751, 1.442695
    %v1877 = vpow.pop %v1876
    %v1878 = vmul.f32 %v1752, 1.442695
    %v1879 = vpow.pop %v1878
    %v1880 = vmul.f32 %v1753, 1.442695
    %v1881 = vpow.pop %v1880
    %v1882 = vadd.f32 %v1755, 1.0
    %v1883 = vadd.f32 %v1757, 1.0
    %v1884 = vadd.f32 %v1759, 1.0
    %v1885 = vadd.f32 %v1761, 1.0
    %v1886 = vadd.f32 %v1763, 1.0
    %v1887 = vadd.f32 %v1765, 1.0
    %v1888 = vadd.f32 %v1767, 1.0
    %v1889 = vadd.f32 %v1769, 1.0
    %v1890 = vadd.f32 %v1771, 1.0
    %v1891 = vadd.f32 %v1773, 1.0
    %v1892 = vadd.f32 %v1775, 1.0
    %v1893 = vadd.f32 %v1777, 1.0
    %v1894 = vadd.f32 %v1779, 1.0
    %v1895 = vadd.f32 %v1781, 1.0
    %v1896 = vadd.f32 %v1783, 1.0
    %v1897 = vadd.f32 %v1785, 1.0
    %v1898 = vadd.f32 %v1787, 1.0
    %v1899 = vadd.f32 %v1789, 1.0
    %v1900 = vadd.f32 %v1791, 1.0
    %v1901 = vadd.f32 %v1793, 1.0
    %v1902 = vadd.f32 %v1795, 1.0
    %v1903 = vadd.f32 %v1797, 1.0
    %v1904 = vadd.f32 %v1799, 1.0
    %v1905 = vadd.f32 %v1801, 1.0
    %v1906 = vadd.f32 %v1803, 1.0
    %v1907 = vadd.f32 %v1805, 1.0
    %v1908 = vadd.f32 %v1807, 1.0
    %v1909 = vadd.f32 %v1809, 1.0
    %v1910 = vadd.f32 %v1811, 1.0
    %v1911 = vadd.f32 %v1813, 1.0
    %v1912 = vadd.f32 %v1815, 1.0
    %v1913 = vadd.f32 %v1817, 1.0
    %v1914 = vadd.f32 %v1819, 1.0
    %v1915 = vadd.f32 %v1821, 1.0
    %v1916 = vadd.f32 %v1823, 1.0
    %v1917 = vadd.f32 %v1825, 1.0
    %v1918 = vadd.f32 %v1827, 1.0
    %v1919 = vadd.f32 %v1829, 1.0
    %v1920 = vadd.f32 %v1831, 1.0
    %v1921 = vadd.f32 %v1833, 1.0
    %v1922 = vadd.f32 %v1835, 1.0
    %v1923 = vadd.f32 %v1837, 1.0
    %v1924 = vadd.f32 %v1839, 1.0
    %v1925 = vadd.f32 %v1841, 1.0
    %v1926 = vadd.f32 %v1843, 1.0
    %v1927 = vadd.f32 %v1845, 1.0
    %v1928 = vadd.f32 %v1847, 1.0
    %v1929 = vadd.f32 %v1849, 1.0
    %v1930 = vadd.f32 %v1851, 1.0
    %v1931 = vadd.f32 %v1853, 1.0
    %v1932 = vadd.f32 %v1855, 1.0
    %v1933 = vadd.f32 %v1857, 1.0
    %v1934 = vadd.f32 %v1859, 1.0
    %v1935 = vadd.f32 %v1861, 1.0
    %v1936 = vadd.f32 %v1863, 1.0
    %v1937 = vadd.f32 %v1865, 1.0
    %v1938 = vadd.f32 %v1867, 1.0
    %v1939 = vadd.f32 %v1869, 1.0
    %v1940 = vadd.f32 %v1871, 1.0
    %v1941 = vadd.f32 %v1873, 1.0
    %v1942 = vadd.f32 %v1875, 1.0
    %v1943 = vadd.f32 %v1877, 1.0
    %v1944 = vadd.f32 %v1879, 1.0
    %v1945 = vadd.f32 %v1881, 1.0
    %v1946 = vrcp.pop %v1882
    %v1947 = vmul.f32 1.0, %v1946
    %v1948 = vrcp.pop %v1883
    %v1949 = vmul.f32 1.0, %v1948
    %v1950 = vrcp.pop %v1884
    %v1951 = vmul.f32 1.0, %v1950
    %v1952 = vrcp.pop %v1885
    %v1953 = vmul.f32 1.0, %v1952
    %v1954 = vrcp.pop %v1886
    %v1955 = vmul.f32 1.0, %v1954
    %v1956 = vrcp.pop %v1887
    %v1957 = vmul.f32 1.0, %v1956
    %v1958 = vrcp.pop %v1888
    %v1959 = vmul.f32 1.0, %v1958
    %v1960 = vrcp.pop %v1889
    %v1961 = vmul.f32 1.0, %v1960
    %v1962 = vrcp.pop %v1890
    %v1963 = vmul.f32 1.0, %v1962
    %v1964 = vrcp.pop %v1891
    %v1965 = vmul.f32 1.0, %v1964
    %v1966 = vrcp.pop %v1892
    %v1967 = vmul.f32 1.0, %v1966
    %v1968 = vrcp.pop %v1893
    %v1969 = vmul.f32 1.0, %v1968
    %v1970 = vrcp.pop %v1894
    %v1971 = vmul.f32 1.0, %v1970
    %v1972 = vrcp.pop %v1895
    %v1973 = vmul.f32 1.0, %v1972
    %v1974 = vrcp.pop %v1896
    %v1975 = vmul.f32 1.0, %v1974
    %v1976 = vrcp.pop %v1897
    %v1977 = vmul.f32 1.0, %v1976
    %v1978 = vrcp.pop %v1898
    %v1979 = vmul.f32 1.0, %v1978
    %v1980 = vrcp.pop %v1899
    %v1981 = vmul.f32 1.0, %v1980
    %v1982 = vrcp.pop %v1900
    %v1983 = vmul.f32 1.0, %v1982
    %v1984 = vrcp.pop %v1901
    %v1985 = vmul.f32 1.0, %v1984
    %v1986 = vrcp.pop %v1902
    %v1987 = vmul.f32 1.0, %v1986
    %v1988 = vrcp.pop %v1903
    %v1989 = vmul.f32 1.0, %v1988
    %v1990 = vrcp.pop %v1904
    %v1991 = vmul.f32 1.0, %v1990
    %v1992 = vrcp.pop %v1905
    %v1993 = vmul.f32 1.0, %v1992
    %v1994 = vrcp.pop %v1906
    %v1995 = vmul.f32 1.0, %v1994
    %v1996 = vrcp.pop %v1907
    %v1997 = vmul.f32 1.0, %v1996
    %v1998 = vrcp.pop %v1908
    %v1999 = vmul.f32 1.0, %v1998
    %v2000 = vrcp.pop %v1909
    %v2001 = vmul.f32 1.0, %v2000
    %v2002 = vrcp.pop %v1910
    %v2003 = vmul.f32 1.0, %v2002
    %v2004 = vrcp.pop %v1911
    %v2005 = vmul.f32 1.0, %v2004
    %v2006 = vrcp.pop %v1912
    %v2007 = vmul.f32 1.0, %v2006
    %v2008 = vrcp.pop %v1913
    %v2009 = vmul.f32 1.0, %v2008
    %v2010 = vrcp.pop %v1914
    %v2011 = vmul.f32 1.0, %v2010
    %v2012 = vrcp.pop %v1915
    %v2013 = vmul.f32 1.0, %v2012
    %v2014 = vrcp.pop %v1916
    %v2015 = vmul.f32 1.0, %v2014
    %v2016 = vrcp.pop %v1917
    %v2017 = vmul.f32 1.0, %v2016
    %v2018 = vrcp.pop %v1918
    %v2019 = vmul.f32 1.0, %v2018
    %v2020 = vrcp.pop %v1919
    %v2021 = vmul.f32 1.0, %v2020
    %v2022 = vrcp.pop %v1920
    %v2023 = vmul.f32 1.0, %v2022
    %v2024 = vrcp.pop %v1921
    %v2025 = vmul.f32 1.0, %v2024
    %v2026 = vrcp.pop %v1922
    %v2027 = vmul.f32 1.0, %v2026
    %v2028 = vrcp.pop %v1923
    %v2029 = vmul.f32 1.0, %v2028
    %v2030 = vrcp.pop %v1924
    %v2031 = vmul.f32 1.0, %v2030
    %v2032 = vrcp.pop %v1925
    %v2033 = vmul.f32 1.0, %v2032
    %v2034 = vrcp.pop %v1926
    %v2035 = vmul.f32 1.0, %v2034
    %v2036 = vrcp.pop %v1927
    %v2037 = vmul.f32 1.0, %v2036
    %v2038 = vrcp.pop %v1928
    %v2039 = vmul.f32 1.0, %v2038
    %v2040 = vrcp.pop %v1929
    %v2041 = vmul.f32 1.0, %v2040
    %v2042 = vrcp.pop %v1930
    %v2043 = vmul.f32 1.0, %v2042
    %v2044 = vrcp.pop %v1931
    %v2045 = vmul.f32 1.0, %v2044
    %v2046 = vrcp.pop %v1932
    %v2047 = vmul.f32 1.0, %v2046
    %v2048 = vrcp.pop %v1933
    %v2049 = vmul.f32 1.0, %v2048
    %v2050 = vrcp.pop %v1934
    %v2051 = vmul.f32 1.0, %v2050
    %v2052 = vrcp.pop %v1935
    %v2053 = vmul.f32 1.0, %v2052
    %v2054 = vrcp.pop %v1936
    %v2055 = vmul.f32 1.0, %v2054
    %v2056 = vrcp.pop %v1937
    %v2057 = vmul.f32 1.0, %v2056
    %v2058 = vrcp.pop %v1938
    %v2059 = vmul.f32 1.0, %v2058
    %v2060 = vrcp.pop %v1939
    %v2061 = vmul.f32 1.0, %v2060
    %v2062 = vrcp.pop %v1940
    %v2063 = vmul.f32 1.0, %v2062
    %v2064 = vrcp.pop %v1941
    %v2065 = vmul.f32 1.0, %v2064
    %v2066 = vrcp.pop %v1942
    %v2067 = vmul.f32 1.0, %v2066
    %v2068 = vrcp.pop %v1943
    %v2069 = vmul.f32 1.0, %v2068
    %v2070 = vrcp.pop %v1944
    %v2071 = vmul.f32 1.0, %v2070
    %v2072 = vrcp.pop %v1945
    %v2073 = vmul.f32 1.0, %v2072
    %v2074 = vmul.f32 %v984, %v1626
    %v2075 = vmul.f32 %v989, %v1627
    %v2076 = vmul.f32 %v994, %v1628
    %v2077 = vmul.f32 %v999, %v1629
    %v2078 = vmul.f32 %v1004, %v1630
    %v2079 = vmul.f32 %v1009, %v1631
    %v2080 = vmul.f32 %v1014, %v1632
    %v2081 = vmul.f32 %v1019, %v1633
    %v2082 = vmul.f32 %v1024, %v1634
    %v2083 = vmul.f32 %v1029, %v1635
    %v2084 = vmul.f32 %v1034, %v1636
    %v2085 = vmul.f32 %v1039, %v1637
    %v2086 = vmul.f32 %v1044, %v1638
    %v2087 = vmul.f32 %v1049, %v1639
    %v2088 = vmul.f32 %v1054, %v1640
    %v2089 = vmul.f32 %v1059, %v1641
    %v2090 = vmul.f32 %v1064, %v1642
    %v2091 = vmul.f32 %v1069, %v1643
    %v2092 = vmul.f32 %v1074, %v1644
    %v2093 = vmul.f32 %v1079, %v1645
    %v2094 = vmul.f32 %v1084, %v1646
    %v2095 = vmul.f32 %v1089, %v1647
    %v2096 = vmul.f32 %v1094, %v1648
    %v2097 = vmul.f32 %v1099, %v1649
    %v2098 = vmul.f32 %v1104, %v1650
    %v2099 = vmul.f32 %v1109, %v1651
    %v2100 = vmul.f32 %v1114, %v1652
    %v2101 = vmul.f32 %v1119, %v1653
    %v2102 = vmul.f32 %v1124, %v1654
    %v2103 = vmul.f32 %v1129, %v1655
    %v2104 = vmul.f32 %v1134, %v1656
    %v2105 = vmul.f32 %v1139, %v1657
    %v2106 = vmul.f32 %v1144, %v1658
    %v2107 = vmul.f32 %v1149, %v1659
    %v2108 = vmul.f32 %v1154, %v1660
    %v2109 = vmul.f32 %v1159, %v1661
    %v2110 = vmul.f32 %v1164, %v1662
    %v2111 = vmul.f32 %v1169, %v1663
    %v2112 = vmul.f32 %v1174, %v1664
    %v2113 = vmul.f32 %v1179, %v1665
    %v2114 = vmul.f32 %v1184, %v1666
    %v2115 = vmul.f32 %v1189, %v1667
    %v2116 = vmul.f32 %v1194, %v1668
    %v2117 = vmul.f32 %v1199, %v1669
    %v2118 = vmul.f32 %v1204, %v1670
    %v2119 = vmul.f32 %v1209, %v1671
    %v2120 = vmul.f32 %v1214, %v1672
    %v2121 = vmul.f32 %v1219, %v1673
    %v2122 = vmul.f32 %v1224, %v1674
    %v2123 = vmul.f32 %v1229, %v1675
    %v2124 = vmul.f32 %v1234, %v1676
    %v2125 = vmul.f32 %v1239, %v1677
    %v2126 = vmul.f32 %v1244, %v1678
    %v2127 = vmul.f32 %v1249, %v1679
    %v2128 = vmul.f32 %v1254, %v1680
    %v2129 = vmul.f32 %v1259, %v1681
    %v2130 = vmul.f32 %v1264, %v1682
    %v2131 = vmul.f32 %v1269, %v1683
    %v2132 = vmul.f32 %v1274, %v1684
    %v2133 = vmul.f32 %v1279, %v1685
    %v2134 = vmul.f32 %v1284, %v1686
    %v2135 = vmul.f32 %v1289, %v1687
    %v2136 = vmul.f32 %v1294, %v1688
    %v2137 = vmul.f32 %v1299, %v1689
    %v2138 = vsel %vm1305, %v1947, 0.0
    %v2139 = vsel %vm1305, %v1949, 0.0
    %v2140 = vsel %vm1305, %v1951, 0.0
    %v2141 = vsel %vm1305, %v1953, 0.0
    %v2142 = vsel %vm1305, %v1955, 0.0
    %v2143 = vsel %vm1305, %v1957, 0.0
    %v2144 = vsel %vm1305, %v1959, 0.0
    %v2145 = vsel %vm1305, %v1961, 0.0
    %v2146 = vsel %vm1305, %v1963, 0.0
    %v2147 = vsel %vm1305, %v1965, 0.0
    %v2148 = vsel %vm1305, %v1967, 0.0
    %v2149 = vsel %vm1305, %v1969, 0.0
    %v2150 = vsel %vm1305, %v1971, 0.0
    %v2151 = vsel %vm1305, %v1973, 0.0
    %v2152 = vsel %vm1305, %v1975, 0.0
    %v2153 = vsel %vm1305, %v1977, 0.0
    %v2154 = vsel %vm1305, %v1979, 0.0
    %v2155 = vsel %vm1305, %v1981, 0.0
    %v2156 = vsel %vm1305, %v1983, 0.0
    %v2157 = vsel %vm1305, %v1985, 0.0
    %v2158 = vsel %vm1305, %v1987, 0.0
    %v2159 = vsel %vm1305, %v1989, 0.0
    %v2160 = vsel %vm1305, %v1991, 0.0
    %v2161 = vsel %vm1305, %v1993, 0.0
    %v2162 = vsel %vm1305, %v1995, 0.0
    %v2163 = vsel %vm1305, %v1997, 0.0
    %v2164 = vsel %vm1305, %v1999, 0.0
    %v2165 = vsel %vm1305, %v2001, 0.0
    %v2166 = vsel %vm1305, %v2003, 0.0
    %v2167 = vsel %vm1305, %v2005, 0.0
    %v2168 = vsel %vm1305, %v2007, 0.0
    %v2169 = vsel %vm1305, %v2009, 0.0
    %v2170 = vsel %vm1305, %v2011, 0.0
    %v2171 = vsel %vm1305, %v2013, 0.0
    %v2172 = vsel %vm1305, %v2015, 0.0
    %v2173 = vsel %vm1305, %v2017, 0.0
    %v2174 = vsel %vm1305, %v2019, 0.0
    %v2175 = vsel %vm1305, %v2021, 0.0
    %v2176 = vsel %vm1305, %v2023, 0.0
    %v2177 = vsel %vm1305, %v2025, 0.0
    %v2178 = vsel %vm1305, %v2027, 0.0
    %v2179 = vsel %vm1305, %v2029, 0.0
    %v2180 = vsel %vm1305, %v2031, 0.0
    %v2181 = vsel %vm1305, %v2033, 0.0
    %v2182 = vsel %vm1305, %v2035, 0.0
    %v2183 = vsel %vm1305, %v2037, 0.0
    %v2184 = vsel %vm1305, %v2039, 0.0
    %v2185 = vsel %vm1305, %v2041, 0.0
    %v2186 = vsel %vm1305, %v2043, 0.0
    %v2187 = vsel %vm1305, %v2045, 0.0
    %v2188 = vsel %vm1305, %v2047, 0.0
    %v2189 = vsel %vm1305, %v2049, 0.0
    %v2190 = vsel %vm1305, %v2051, 0.0
    %v2191 = vsel %vm1305, %v2053, 0.0
    %v2192 = vsel %vm1305, %v2055, 0.0
    %v2193 = vsel %vm1305, %v2057, 0.0
    %v2194 = vsel %vm1305, %v2059, 0.0
    %v2195 = vsel %vm1305, %v2061, 0.0
    %v2196 = vsel %vm1305, %v2063, 0.0
    %v2197 = vsel %vm1305, %v2065, 0.0
    %v2198 = vsel %vm1305, %v2067, 0.0
    %v2199 = vsel %vm1305, %v2069, 0.0
    %v2200 = vsel %vm1305, %v2071, 0.0
    %v2201 = vsel %vm1305, %v2073, 0.0
    %v2202 = vsel %vm1304, %v2074, %v2138
    %v2203 = vsel %vm1304, %v2075, %v2139
    %v2204 = vsel %vm1304, %v2076, %v2140
    %v2205 = vsel %vm1304, %v2077, %v2141
    %v2206 = vsel %vm1304, %v2078, %v2142
    %v2207 = vsel %vm1304, %v2079, %v2143
    %v2208 = vsel %vm1304, %v2080, %v2144
    %v2209 = vsel %vm1304, %v2081, %v2145
    %v2210 = vsel %vm1304, %v2082, %v2146
    %v2211 = vsel %vm1304, %v2083, %v2147
    %v2212 = vsel %vm1304, %v2084, %v2148
    %v2213 = vsel %vm1304, %v2085, %v2149
    %v2214 = vsel %vm1304, %v2086, %v2150
    %v2215 = vsel %vm1304, %v2087, %v2151
    %v2216 = vsel %vm1304, %v2088, %v2152
    %v2217 = vsel %vm1304, %v2089, %v2153
    %v2218 = vsel %vm1304, %v2090, %v2154
    %v2219 = vsel %vm1304, %v2091, %v2155
    %v2220 = vsel %vm1304, %v2092, %v2156
    %v2221 = vsel %vm1304, %v2093, %v2157
    %v2222 = vsel %vm1304, %v2094, %v2158
    %v2223 = vsel %vm1304, %v2095, %v2159
    %v2224 = vsel %vm1304, %v2096, %v2160
    %v2225 = vsel %vm1304, %v2097, %v2161
    %v2226 = vsel %vm1304, %v2098, %v2162
    %v2227 = vsel %vm1304, %v2099, %v2163
    %v2228 = vsel %vm1304, %v2100, %v2164
    %v2229 = vsel %vm1304, %v2101, %v2165
    %v2230 = vsel %vm1304, %v2102, %v2166
    %v2231 = vsel %vm1304, %v2103, %v2167
    %v2232 = vsel %vm1304, %v2104, %v2168
    %v2233 = vsel %vm1304, %v2105, %v2169
    %v2234 = vsel %vm1304, %v2106, %v2170
    %v2235 = vsel %vm1304, %v2107, %v2171
    %v2236 = vsel %vm1304, %v2108, %v2172
    %v2237 = vsel %vm1304, %v2109, %v2173
    %v2238 = vsel %vm1304, %v2110, %v2174
    %v2239 = vsel %vm1304, %v2111, %v2175
    %v2240 = vsel %vm1304, %v2112, %v2176
    %v2241 = vsel %vm1304, %v2113, %v2177
    %v2242 = vsel %vm1304, %v2114, %v2178
    %v2243 = vsel %vm1304, %v2115, %v2179
    %v2244 = vsel %vm1304, %v2116, %v2180
    %v2245 = vsel %vm1304, %v2117, %v2181
    %v2246 = vsel %vm1304, %v2118, %v2182
    %v2247 = vsel %vm1304, %v2119, %v2183
    %v2248 = vsel %vm1304, %v2120, %v2184
    %v2249 = vsel %vm1304, %v2121, %v2185
    %v2250 = vsel %vm1304, %v2122, %v2186
    %v2251 = vsel %vm1304, %v2123, %v2187
    %v2252 = vsel %vm1304, %v2124, %v2188
    %v2253 = vsel %vm1304, %v2125, %v2189
    %v2254 = vsel %vm1304, %v2126, %v2190
    %v2255 = vsel %vm1304, %v2127, %v2191
    %v2256 = vsel %vm1304, %v2128, %v2192
    %v2257 = vsel %vm1304, %v2129, %v2193
    %v2258 = vsel %vm1304, %v2130, %v2194
    %v2259 = vsel %vm1304, %v2131, %v2195
    %v2260 = vsel %vm1304, %v2132, %v2196
    %v2261 = vsel %vm1304, %v2133, %v2197
    %v2262 = vsel %vm1304, %v2134, %v2198
    %v2263 = vsel %vm1304, %v2135, %v2199
    %v2264 = vsel %vm1304, %v2136, %v2200
    %v2265 = vsel %vm1304, %v2137, %v2201
    %2266 = vst [vmem:[#allocation2] sm:$0xff] %v2202
    %2267 = vst [vmem:[#allocation2 + $0x8] sm:$0xff] %v2203
    %2268 = vst [vmem:[#allocation2 + $0x10] sm:$0xff] %v2204
    %2269 = vst [vmem:[#allocation2 + $0x18] sm:$0xff] %v2205
    %2270 = vst [vmem:[#allocation2 + $0x20] sm:$0xff] %v2206
    %2271 = vst [vmem:[#allocation2 + $0x28] sm:$0xff] %v2207
    %2272 = vst [vmem:[#allocation2 + $0x30] sm:$0xff] %v2208
    %2273 = vst [vmem:[#allocation2 + $0x38] sm:$0xff] %v2209
    %2274 = vst [vmem:[#allocation2 + $0x40] sm:$0xff] %v2210
    %2275 = vst [vmem:[#allocation2 + $0x48] sm:$0xff] %v2211
    %2276 = vst [vmem:[#allocation2 + $0x50] sm:$0xff] %v2212
    %2277 = vst [vmem:[#allocation2 + $0x58] sm:$0xff] %v2213
    %2278 = vst [vmem:[#allocation2 + $0x60] sm:$0xff] %v2214
    %2279 = vst [vmem:[#allocation2 + $0x68] sm:$0xff] %v2215
    %2280 = vst [vmem:[#allocation2 + $0x70] sm:$0xff] %v2216
    %2281 = vst [vmem:[#allocation2 + $0x78] sm:$0xff] %v2217
    %2282 = vst [vmem:[#allocation2 + $0x80] sm:$0xff] %v2218
    %2283 = vst [vmem:[#allocation2 + $0x88] sm:$0xff] %v2219
    %2284 = vst [vmem:[#allocation2 + $0x90] sm:$0xff] %v2220
    %2285 = vst [vmem:[#allocation2 + $0x98] sm:$0xff] %v2221
    %2286 = vst [vmem:[#allocation2 + $0xa0] sm:$0xff] %v2222
    %2287 = vst [vmem:[#allocation2 + $0xa8] sm:$0xff] %v2223
    %2288 = vst [vmem:[#allocation2 + $0xb0] sm:$0xff] %v2224
    %2289 = vst [vmem:[#allocation2 + $0xb8] sm:$0xff] %v2225
    %2290 = vst [vmem:[#allocation2 + $0xc0] sm:$0xff] %v2226
    %2291 = vst [vmem:[#allocation2 + $0xc8] sm:$0xff] %v2227
    %2292 = vst [vmem:[#allocation2 + $0xd0] sm:$0xff] %v2228
    %2293 = vst [vmem:[#allocation2 + $0xd8] sm:$0xff] %v2229
    %2294 = vst [vmem:[#allocation2 + $0xe0] sm:$0xff] %v2230
    %2295 = vst [vmem:[#allocation2 + $0xe8] sm:$0xff] %v2231
    %2296 = vst [vmem:[#allocation2 + $0xf0] sm:$0xff] %v2232
    %2297 = vst [vmem:[#allocation2 + $0xf8] sm:$0xff] %v2233
    %2298 = vst [vmem:[#allocation2 + $0x100] sm:$0xff] %v2234
    %2299 = vst [vmem:[#allocation2 + $0x108] sm:$0xff] %v2235
    %2300 = vst [vmem:[#allocation2 + $0x110] sm:$0xff] %v2236
    %2301 = vst [vmem:[#allocation2 + $0x118] sm:$0xff] %v2237
    %2302 = vst [vmem:[#allocation2 + $0x120] sm:$0xff] %v2238
    %2303 = vst [vmem:[#allocation2 + $0x128] sm:$0xff] %v2239
    %2304 = vst [vmem:[#allocation2 + $0x130] sm:$0xff] %v2240
    %2305 = vst [vmem:[#allocation2 + $0x138] sm:$0xff] %v2241
    %2306 = vst [vmem:[#allocation2 + $0x140] sm:$0xff] %v2242
    %2307 = vst [vmem:[#allocation2 + $0x148] sm:$0xff] %v2243
    %2308 = vst [vmem:[#allocation2 + $0x150] sm:$0xff] %v2244
    %2309 = vst [vmem:[#allocation2 + $0x158] sm:$0xff] %v2245
    %2310 = vst [vmem:[#allocation2 + $0x160] sm:$0xff] %v2246
    %2311 = vst [vmem:[#allocation2 + $0x168] sm:$0xff] %v2247
    %2312 = vst [vmem:[#allocation2 + $0x170] sm:$0xff] %v2248
    %2313 = vst [vmem:[#allocation2 + $0x178] sm:$0xff] %v2249
    %2314 = vst [vmem:[#allocation2 + $0x180] sm:$0xff] %v2250
    %2315 = vst [vmem:[#allocation2 + $0x188] sm:$0xff] %v2251
    %2316 = vst [vmem:[#allocation2 + $0x190] sm:$0xff] %v2252
    %2317 = vst [vmem:[#allocation2 + $0x198] sm:$0xff] %v2253
    %2318 = vst [vmem:[#allocation2 + $0x1a0] sm:$0xff] %v2254
    %2319 = vst [vmem:[#allocation2 + $0x1a8] sm:$0xff] %v2255
    %2320 = vst [vmem:[#allocation2 + $0x1b0] sm:$0xff] %v2256
    %2321 = vst [vmem:[#allocation2 + $0x1b8] sm:$0xff] %v2257
    %2322 = vst [vmem:[#allocation2 + $0x1c0] sm:$0xff] %v2258
    %2323 = vst [vmem:[#allocation2 + $0x1c8] sm:$0xff] %v2259
    %2324 = vst [vmem:[#allocation2 + $0x1d0] sm:$0xff] %v2260
    %2325 = vst [vmem:[#allocation2 + $0x1d8] sm:$0xff] %v2261
    %2326 = vst [vmem:[#allocation2 + $0x1e0] sm:$0xff] %v2262
    %2327 = vst [vmem:[#allocation2 + $0x1e8] sm:$0xff] %v2263
    %2328 = vst [vmem:[#allocation2 + $0x1f0] sm:$0xff] %v2264
    %2329 = vst [vmem:[#allocation2 + $0x1f8] sm:$0xff] %v2265
    // Predicated region
    $region14: #{tpu_custom_call.1} parent=1 // pred_check
      _
    $region15: #{tpu_custom_call.1} parent=1 // pred_check_branch
      %2331 = sbr.rel (0) target = $region17
    $region16: #{tpu_custom_call.1} parent=1 // pred_region
      %s2333 = ssub.s32 8192, 8192
      %2334 = vsyncadd [#allocation3], %s2333
      %s2335 = sshll.u32 [#allocation2], 4
      %s2336 = int_to_ptr.vmem [resolvable:$true] %s2335
      %2341 = dma.vmem_to_hbm [thread:$0]  %s2336, 8192, %s3, [#allocation3], 128, 128, 8
    $region17: #{tpu_custom_call.1} parent=1 // pred_fallthru
      _
    // Predicated region
    $region18: #{tpu_custom_call.1} parent=1 // pred_check
      _
    $region19: #{tpu_custom_call.1} parent=1 // pred_check_branch
      %2343 = sbr.rel (0) target = $region21
    $region20: #{tpu_custom_call.1} parent=1 // pred_region
      %2344 = dma.done [#allocation3], 8192
    $region21: #{tpu_custom_call.1} parent=1 // pred_fallthru
      _
    %2345 = vsyncpa [#allocation3], 1

</llo_original>
